<compile_context>
chip_gen: v7x
topology: tpu7x:2x2x1
jax: 0.10.0
libtpu: 0.0.40
codegen_flags: <defaults>
</compile_context>

<pallas_src>
import functools

import jax
import jax.numpy as jnp
from jax import lax
from jax.experimental import pallas as pl
from jax.experimental.pallas import tpu as pltpu


def _row_tile(n, target=256):
    """Largest row tile (multiple of 8, divides n) up to `target`; else full n."""
    if n <= target:
        return n
    for t in (target, 128, 64, 32, 16, 8):
        if n % t == 0:
            return t
    return n


# ---------------------------------------------------------------------------
# Kernel 1: fused (optional input ELU) + all-heads fc matmul (lane-dense out)
# ---------------------------------------------------------------------------
def _make_proj_kernel(apply_input_elu):
    def kernel(h_ref, w_ref, g_ref):
        h = h_ref[...]                                  # [T, F] f32
        if apply_input_elu:
            # ELU(alpha=1) of the previous layer's output, fused here (f32).
            h = jnp.where(h > 0, h, jnp.exp(h) - 1.0)
        # Single bf16 MXU matmul over ALL heads -> [T, K*Hh].
        g_ref[...] = jnp.dot(h.astype(jnp.bfloat16), w_ref[...],
                             preferred_element_type=jnp.float32)
    return kernel


# ---------------------------------------------------------------------------
# Kernel 2: attention logits + masked softmax + aggregation, per row tile
# ---------------------------------------------------------------------------
def _make_attn_kernel(K, Hh, slope):
    def kernel(gt_ref, gf_ref, asrc_ref, adst_ref, bias_ref, out_ref):
        a_src = asrc_ref[...]                           # [1, Hh] (shared by heads)
        a_dst = adst_ref[...]                           # [1, Hh]
        bias = bias_ref[...]                            # [T, N] additive mask (0 / -1e30)
        g_tile = gt_ref[...]                            # [T, K*Hh] f32 (this tile's rows)
        g_full = gf_ref[...]                            # [N, K*Hh] f32 (all neighbors)

        parts = []
        for k in range(K):                              # K small & static (unrolled)
            lo = k * Hh
            gk_t = g_tile[:, lo:lo + Hh]                # [T, Hh]  static slice
            gk_f = g_full[:, lo:lo + Hh]                # [N, Hh]  static slice

            # e[i, j] = g_i . a_src + g_j . a_dst   (attn_fc on concat(g_i, g_j))
            es = jnp.sum(gk_t * a_src, axis=1, keepdims=True)          # [T, 1] VPU+XLU
            ed = lax.dot_general(a_dst, gk_f, (((1,), (1,)), ((), ())),
                                 preferred_element_type=jnp.float32)   # [1, N] lane-dense
            e = es + ed                                                 # [T, N] implicit bcast
            e = jnp.where(e >= 0, e, slope * e)                         # LeakyReLU
            e = e + bias                                                # mask non-edges

            # softmax over neighbors j; normalization deferred past the matmul
            m = jnp.max(e, axis=1, keepdims=True)
            p = jnp.exp(e - m)
            s = jnp.sum(p, axis=1, keepdims=True)
            agg = jnp.dot(p.astype(jnp.bfloat16), gk_f.astype(jnp.bfloat16),
                          preferred_element_type=jnp.float32)           # [T, Hh]
            parts.append(agg * pl.reciprocal(s, approx=True))
            # (attention dropout is identity in eval mode)

        # One lane-dense store of all heads.
        out_ref[...] = parts[0] if K == 1 else jnp.concatenate(parts, axis=1)
    return kernel


# ---------------------------------------------------------------------------
# One GATLayer forward (concat over heads); mask_bias is shared across layers
# ---------------------------------------------------------------------------
def gat_layer(h, mask_bias, W, a_src, a_dst, *, slope=0.2, apply_input_elu=False):
    h = h.astype(jnp.float32)
    N, F = h.shape
    KH = W.shape[1]
    Hh = a_src.shape[1]
    K = KH // Hh
    TM = _row_tile(N)
    nt = N // TM

    # ---- kernel 1: fused (optional ELU) + all-heads fc matmul ---------------
    g = pl.pallas_call(
        _make_proj_kernel(bool(apply_input_elu)),
        out_shape=jax.ShapeDtypeStruct((N, KH), jnp.float32),
        grid=(nt,),
        in_specs=[
            pl.BlockSpec((TM, F), lambda i: (i, 0)),
            pl.BlockSpec((F, KH), lambda i: (0, 0)),
        ],
        out_specs=pl.BlockSpec((TM, KH), lambda i: (i, 0)),
        compiler_params=pltpu.CompilerParams(
            dimension_semantics=("parallel",)),
    )(h, W.astype(jnp.bfloat16))

    # ---- kernel 2: attention + aggregation, tiled over query-node rows ------
    out = pl.pallas_call(
        _make_attn_kernel(K, Hh, float(slope)),
        out_shape=jax.ShapeDtypeStruct((N, KH), jnp.float32),
        grid=(nt,),
        in_specs=[
            pl.BlockSpec((TM, KH), lambda i: (i, 0)),   # g rows of this tile
            pl.BlockSpec((N, KH), lambda i: (0, 0)),    # g for all neighbors
            pl.BlockSpec((1, Hh), lambda i: (0, 0)),    # a_src
            pl.BlockSpec((1, Hh), lambda i: (0, 0)),    # a_dst
            pl.BlockSpec((TM, N), lambda i: (i, 0)),    # additive mask bias
        ],
        out_specs=pl.BlockSpec((TM, KH), lambda i: (i, 0)),
        compiler_params=pltpu.CompilerParams(
            dimension_semantics=("parallel",)),
    )(g, g, a_src, a_dst, mask_bias)
    return out


# ---------------------------------------------------------------------------
# Glue: adjacency construction (self-loops + learned edge-mask scatter) ->
# additive softmax mask bias, computed ONCE per forward, shared by all layers.
# ---------------------------------------------------------------------------
def build_mask_bias(edge_index, adj_mask, n_nodes):
    # torch: edge_index = cat([edge_index, eyes]); adj[ei0, ei1] = mask; diag = 1
    eyes = jnp.stack([jnp.arange(n_nodes), jnp.arange(n_nodes)])
    ei = jnp.concatenate([edge_index, eyes], axis=1)               # [2, E + N]
    vals = jnp.broadcast_to(adj_mask.reshape(-1), (ei.shape[1],)).astype(jnp.float32)
    adj = jnp.zeros((n_nodes, n_nodes), jnp.float32)
    adj = adj.at[ei[0], ei[1]].set(vals)
    adj = adj.at[jnp.arange(n_nodes), jnp.arange(n_nodes)].set(1.0)
    # Reference only tests adj == 0 (masked_fill); -1e30 bias instead of -inf
    # is NaN-safe and equivalent after exp underflow (diagonal is always 1.0).
    return jnp.where(adj == 0.0, jnp.float32(-1e30), jnp.float32(0.0))


# ---------------------------------------------------------------------------
# GATNet: deterministic parameter init + forward
# ---------------------------------------------------------------------------
def init_gatnet_params(key, in_dim, hidden_dim, out_dim, num_heads, n_layers,
                       edge_num):
    params = {"hidden_layers": []}
    keys = jax.random.split(key, 3 * (n_layers + 1) + 1)
    ki = 0

    def linear_w(k, fan_in, fan_out):
        # deterministic small init (synthetic weights, not a checkpoint)
        return 0.1 * jax.random.normal(k, (fan_in, fan_out), jnp.float32)

    for _ in range(n_layers):                   # GATLayer(in_dim, hidden_dim, K)
        Hh = hidden_dim // num_heads
        W = linear_w(keys[ki], in_dim, num_heads * Hh); ki += 1
        a_src = 0.1 * jax.random.normal(keys[ki], (1, Hh), jnp.float32); ki += 1
        a_dst = 0.1 * jax.random.normal(keys[ki], (1, Hh), jnp.float32); ki += 1
        params["hidden_layers"].append({"W": W, "a_src": a_src, "a_dst": a_dst})

    # last layer: GATLayer(hidden_dim, out_dim, n_heads=1, is_concat=False)
    W = linear_w(keys[ki], hidden_dim, out_dim); ki += 1
    a_src = 0.1 * jax.random.normal(keys[ki], (1, out_dim), jnp.float32); ki += 1
    a_dst = 0.1 * jax.random.normal(keys[ki], (1, out_dim), jnp.float32); ki += 1
    params["last_layer"] = {"W": W, "a_src": a_src, "a_dst": a_dst}

    # adj_mask1_train ~ Normal(mean=1, std=1e-4), shape [1, edge_num]
    params["adj_mask"] = 1.0 + 1e-4 * jax.random.normal(
        keys[ki], (1, edge_num), jnp.float32)
    return params


@jax.jit
def gatnet_forward(params, x, edge_index):
    N = x.shape[0]
    mask_bias = build_mask_bias(edge_index, params["adj_mask"], N)
    pred = x
    for lp in params["hidden_layers"]:                           # layers[:-1]
        pred = gat_layer(pred, mask_bias, lp["W"], lp["a_src"], lp["a_dst"],
                         slope=0.2, apply_input_elu=False)
    # ELU + dropout (identity in eval) fused as input activation of last layer.
    lp = params["last_layer"]
    pred = gat_layer(pred, mask_bias, lp["W"], lp["a_src"], lp["a_dst"],
                     slope=0.2, apply_input_elu=True)
    # is_concat=False with 1 head: mean over the single head == identity.
    return pred


if __name__ == "__main__":
    key = jax.random.PRNGKey(0)
    N, in_dim, hidden_dim, out_dim = 16, 8, 16, 4
    num_heads, n_layers = 4, 1
    E = 32
    edge_num = E + N            # torch code appends N self-loops before masking

    kx, ks, kd, kp = jax.random.split(key, 4)
    x = jax.random.normal(kx, (N, in_dim), jnp.float32)
    src = jax.random.randint(ks, (E,), 0, N, dtype=jnp.int32)
    dst = jax.random.randint(kd, (E,), 0, N, dtype=jnp.int32)
    edge_index = jnp.stack([src, dst])                          # [2, E]

    params = init_gatnet_params(kp, in_dim, hidden_dim, out_dim,
                                num_heads, n_layers, edge_num)

    out = gatnet_forward(params, x, edge_index)
    out = jax.block_until_ready(out)

    assert out.shape == (N, out_dim), out.shape
    assert bool(jnp.all(jnp.isfinite(out)))
    # TODO(synk): dropout layers are treated as eval-mode identities (no RNG).
    print("KERNEL_OK")
</pallas_src>

<mosaic_0001>
module attributes {stable_mosaic.version = 11 : i64} {
  func.func @kernel(%arg0: i32, %arg1: memref<16x8xf32, #tpu.memory_space<vmem>>, %arg2: memref<8x16xbf16, #tpu.memory_space<vmem>>, %arg3: memref<16x16xf32, #tpu.memory_space<vmem>>) attributes {dimension_semantics = [#tpu.dimension_semantics<parallel>], iteration_bounds = array<i64: 1>, scalar_prefetch = 0 : i64, scratch_operands = 0 : i64, tpu.core_type = #tpu.core_type<tc>, window_params = [{transform_indices = @transform_0, window_bounds = array<i64: 16, 8>}, {pipeline_mode = #tpu.pipeline_mode<synchronous>, transform_indices = @transform_1, window_bounds = array<i64: 8, 16>}, {transform_indices = @transform_2, window_bounds = array<i64: 16, 16>}]} {
    %c0 = arith.constant 0 : index
    %c0_0 = arith.constant 0 : index
    %0 = vector.load %arg1[%c0, %c0_0] : memref<16x8xf32, #tpu.memory_space<vmem>>, vector<16x8xf32>
    %1 = arith.truncf %0 : vector<16x8xf32> to vector<16x8xbf16>
    %c0_1 = arith.constant 0 : index
    %c0_2 = arith.constant 0 : index
    %2 = vector.load %arg2[%c0_1, %c0_2] : memref<8x16xbf16, #tpu.memory_space<vmem>>, vector<8x16xbf16>
    %cst = arith.constant dense<0.000000e+00> : vector<16x16xf32>
    %3 = tpu.matmul %1, %2, %cst {dimension_numbers = #tpu.dot_dimension_numbers<[1], [0], [0], [1], [0, 0, 1, 1], [], []>} : vector<16x8xbf16>, vector<8x16xbf16>, vector<16x16xf32> -> vector<16x16xf32>
    %c0_3 = arith.constant 0 : index
    %c0_4 = arith.constant 0 : index
    %4 = vector.load %arg3[%c0_3, %c0_4] : memref<16x16xf32, #tpu.memory_space<vmem>>, vector<16x16xf32>
    tpu.vector_store %arg3[%c0_3, %c0_4], %3 {strides = array<i32>} : memref<16x16xf32, #tpu.memory_space<vmem>>, vector<16x16xf32>,
    return
  }
  func.func @transform_0(%arg0: i32) -> (i32, i32) {
    %c0_i32 = arith.constant 0 : i32
    %c0_i32_0 = arith.constant 0 : i32
    return %arg0, %c0_i32 : i32, i32
  }
  func.func @transform_1(%arg0: i32) -> (i32, i32) {
    %c0_i32 = arith.constant 0 : i32
    %c0_i32_0 = arith.constant 0 : i32
    %c0_i32_1 = arith.constant 0 : i32
    return %c0_i32, %c0_i32_0 : i32, i32
  }
  func.func @transform_2(%arg0: i32) -> (i32, i32) {
    %c0_i32 = arith.constant 0 : i32
    %c0_i32_0 = arith.constant 0 : i32
    return %arg0, %c0_i32 : i32, i32
  }
}

module attributes {stable_mosaic.version = 11 : i64} {
  func.func @kernel(%arg0: i32, %arg1: memref<16x16xf32, #tpu.memory_space<vmem>>, %arg2: memref<16x16xf32, #tpu.memory_space<vmem>>, %arg3: memref<1x4xf32, #tpu.memory_space<vmem>>, %arg4: memref<1x4xf32, #tpu.memory_space<vmem>>, %arg5: memref<16x16xf32, #tpu.memory_space<vmem>>, %arg6: memref<16x16xf32, #tpu.memory_space<vmem>>) attributes {dimension_semantics = [#tpu.dimension_semantics<parallel>], iteration_bounds = array<i64: 1>, scalar_prefetch = 0 : i64, scratch_operands = 0 : i64, tpu.core_type = #tpu.core_type<tc>, window_params = [{transform_indices = @transform_0, window_bounds = array<i64: 16, 16>}, {pipeline_mode = #tpu.pipeline_mode<synchronous>, transform_indices = @transform_1, window_bounds = array<i64: 16, 16>}, {pipeline_mode = #tpu.pipeline_mode<synchronous>, transform_indices = @transform_2, window_bounds = array<i64: 1, 4>}, {pipeline_mode = #tpu.pipeline_mode<synchronous>, transform_indices = @transform_3, window_bounds = array<i64: 1, 4>}, {transform_indices = @transform_4, window_bounds = array<i64: 16, 16>}, {transform_indices = @transform_5, window_bounds = array<i64: 16, 16>}]} {
    %c0 = arith.constant 0 : index
    %c0_0 = arith.constant 0 : index
    %0 = vector.load %arg3[%c0, %c0_0] : memref<1x4xf32, #tpu.memory_space<vmem>>, vector<1x4xf32>
    %c0_1 = arith.constant 0 : index
    %c0_2 = arith.constant 0 : index
    %1 = vector.load %arg4[%c0_1, %c0_2] : memref<1x4xf32, #tpu.memory_space<vmem>>, vector<1x4xf32>
    %c0_3 = arith.constant 0 : index
    %c0_4 = arith.constant 0 : index
    %2 = vector.load %arg5[%c0_3, %c0_4] : memref<16x16xf32, #tpu.memory_space<vmem>>, vector<16x16xf32>
    %c0_5 = arith.constant 0 : index
    %c0_6 = arith.constant 0 : index
    %3 = vector.load %arg1[%c0_5, %c0_6] : memref<16x16xf32, #tpu.memory_space<vmem>>, vector<16x16xf32>
    %c0_7 = arith.constant 0 : index
    %c0_8 = arith.constant 0 : index
    %4 = vector.load %arg2[%c0_7, %c0_8] : memref<16x16xf32, #tpu.memory_space<vmem>>, vector<16x16xf32>
    %5 = vector.extract_strided_slice %3 {offsets = [0, 0], sizes = [16, 4], strides = [1, 1]} : vector<16x16xf32> to vector<16x4xf32>
    %6 = vector.extract_strided_slice %4 {offsets = [0, 0], sizes = [16, 4], strides = [1, 1]} : vector<16x16xf32> to vector<16x4xf32>
    %7 = vector.broadcast %0 : vector<1x4xf32> to vector<16x4xf32>
    %8 = arith.mulf %5, %7 : vector<16x4xf32>
    %cst = arith.constant dense<0.000000e+00> : vector<16xf32>
    %9 = vector.multi_reduction <add>, %8, %cst [1] : vector<16x4xf32> to vector<16xf32>
    %10 = vector.shape_cast %9 : vector<16xf32> to vector<16x1xf32>
    %cst_9 = arith.constant dense<0.000000e+00> : vector<1x16xf32>
    %11 = tpu.matmul %1, %6, %cst_9 {dimension_numbers = #tpu.dot_dimension_numbers<[1], [1], [0], [0], [0, 0, 1, 0], [], []>} : vector<1x4xf32>, vector<16x4xf32>, vector<1x16xf32> -> vector<1x16xf32>
    %12 = vector.broadcast %10 : vector<16x1xf32> to vector<16x16xf32>
    %13 = vector.broadcast %11 : vector<1x16xf32> to vector<16x16xf32>
    %14 = arith.addf %12, %13 : vector<16x16xf32>
    %cst_10 = arith.constant 0.000000e+00 : f32
    %15 = vector.broadcast %cst_10 : f32 to vector<16x16xf32>
    %16 = arith.cmpf oge, %14, %15 : vector<16x16xf32>
    %cst_11 = arith.constant 2.000000e-01 : f32
    %17 = vector.broadcast %cst_11 : f32 to vector<16x16xf32>
    %18 = arith.mulf %17, %14 : vector<16x16xf32>
    %19 = arith.select %16, %14, %18 : vector<16x16xi1>, vector<16x16xf32>
    %20 = arith.addf %19, %2 : vector<16x16xf32>
    %cst_12 = arith.constant dense<0xFF800000> : vector<16xf32>
    %21 = vector.multi_reduction <maximumf>, %20, %cst_12 [1] : vector<16x16xf32> to vector<16xf32>
    %22 = vector.shape_cast %21 : vector<16xf32> to vector<16x1xf32>
    %23 = vector.broadcast %22 : vector<16x1xf32> to vector<16x16xf32>
    %24 = arith.subf %20, %23 : vector<16x16xf32>
    %25 = math.exp %24 : vector<16x16xf32>
    %cst_13 = arith.constant dense<0.000000e+00> : vector<16xf32>
    %26 = vector.multi_reduction <add>, %25, %cst_13 [1] : vector<16x16xf32> to vector<16xf32>
    %27 = vector.shape_cast %26 : vector<16xf32> to vector<16x1xf32>
    %28 = arith.truncf %25 : vector<16x16xf32> to vector<16x16xbf16>
    %29 = arith.truncf %6 : vector<16x4xf32> to vector<16x4xbf16>
    %cst_14 = arith.constant dense<0.000000e+00> : vector<16x4xf32>
    %30 = tpu.matmul %28, %29, %cst_14 {dimension_numbers = #tpu.dot_dimension_numbers<[1], [0], [0], [1], [0, 0, 1, 1], [], []>} : vector<16x16xbf16>, vector<16x4xbf16>, vector<16x4xf32> -> vector<16x4xf32>
    %31 = tpu.reciprocal %27 {approx = true} : vector<16x1xf32> -> vector<16x1xf32>
    %32 = vector.broadcast %31 : vector<16x1xf32> to vector<16x4xf32>
    %33 = arith.mulf %30, %32 : vector<16x4xf32>
    %34 = vector.extract_strided_slice %3 {offsets = [0, 4], sizes = [16, 4], strides = [1, 1]} : vector<16x16xf32> to vector<16x4xf32>
    %35 = vector.extract_strided_slice %4 {offsets = [0, 4], sizes = [16, 4], strides = [1, 1]} : vector<16x16xf32> to vector<16x4xf32>
    %36 = vector.broadcast %0 : vector<1x4xf32> to vector<16x4xf32>
    %37 = arith.mulf %34, %36 : vector<16x4xf32>
    %cst_15 = arith.constant dense<0.000000e+00> : vector<16xf32>
    %38 = vector.multi_reduction <add>, %37, %cst_15 [1] : vector<16x4xf32> to vector<16xf32>
    %39 = vector.shape_cast %38 : vector<16xf32> to vector<16x1xf32>
    %cst_16 = arith.constant dense<0.000000e+00> : vector<1x16xf32>
    %40 = tpu.matmul %1, %35, %cst_16 {dimension_numbers = #tpu.dot_dimension_numbers<[1], [1], [0], [0], [0, 0, 1, 0], [], []>} : vector<1x4xf32>, vector<16x4xf32>, vector<1x16xf32> -> vector<1x16xf32>
    %41 = vector.broadcast %39 : vector<16x1xf32> to vector<16x16xf32>
    %42 = vector.broadcast %40 : vector<1x16xf32> to vector<16x16xf32>
    %43 = arith.addf %41, %42 : vector<16x16xf32>
    %cst_17 = arith.constant 0.000000e+00 : f32
    %44 = vector.broadcast %cst_17 : f32 to vector<16x16xf32>
    %45 = arith.cmpf oge, %43, %44 : vector<16x16xf32>
    %cst_18 = arith.constant 2.000000e-01 : f32
    %46 = vector.broadcast %cst_18 : f32 to vector<16x16xf32>
    %47 = arith.mulf %46, %43 : vector<16x16xf32>
    %48 = arith.select %45, %43, %47 : vector<16x16xi1>, vector<16x16xf32>
    %49 = arith.addf %48, %2 : vector<16x16xf32>
    %cst_19 = arith.constant dense<0xFF800000> : vector<16xf32>
    %50 = vector.multi_reduction <maximumf>, %49, %cst_19 [1] : vector<16x16xf32> to vector<16xf32>
    %51 = vector.shape_cast %50 : vector<16xf32> to vector<16x1xf32>
    %52 = vector.broadcast %51 : vector<16x1xf32> to vector<16x16xf32>
    %53 = arith.subf %49, %52 : vector<16x16xf32>
    %54 = math.exp %53 : vector<16x16xf32>
    %cst_20 = arith.constant dense<0.000000e+00> : vector<16xf32>
    %55 = vector.multi_reduction <add>, %54, %cst_20 [1] : vector<16x16xf32> to vector<16xf32>
    %56 = vector.shape_cast %55 : vector<16xf32> to vector<16x1xf32>
    %57 = arith.truncf %54 : vector<16x16xf32> to vector<16x16xbf16>
    %58 = arith.truncf %35 : vector<16x4xf32> to vector<16x4xbf16>
    %cst_21 = arith.constant dense<0.000000e+00> : vector<16x4xf32>
    %59 = tpu.matmul %57, %58, %cst_21 {dimension_numbers = #tpu.dot_dimension_numbers<[1], [0], [0], [1], [0, 0, 1, 1], [], []>} : vector<16x16xbf16>, vector<16x4xbf16>, vector<16x4xf32> -> vector<16x4xf32>
    %60 = tpu.reciprocal %56 {approx = true} : vector<16x1xf32> -> vector<16x1xf32>
    %61 = vector.broadcast %60 : vector<16x1xf32> to vector<16x4xf32>
    %62 = arith.mulf %59, %61 : vector<16x4xf32>
    %63 = vector.extract_strided_slice %3 {offsets = [0, 8], sizes = [16, 4], strides = [1, 1]} : vector<16x16xf32> to vector<16x4xf32>
    %64 = vector.extract_strided_slice %4 {offsets = [0, 8], sizes = [16, 4], strides = [1, 1]} : vector<16x16xf32> to vector<16x4xf32>
    %65 = vector.broadcast %0 : vector<1x4xf32> to vector<16x4xf32>
    %66 = arith.mulf %63, %65 : vector<16x4xf32>
    %cst_22 = arith.constant dense<0.000000e+00> : vector<16xf32>
    %67 = vector.multi_reduction <add>, %66, %cst_22 [1] : vector<16x4xf32> to vector<16xf32>
    %68 = vector.shape_cast %67 : vector<16xf32> to vector<16x1xf32>
    %cst_23 = arith.constant dense<0.000000e+00> : vector<1x16xf32>
    %69 = tpu.matmul %1, %64, %cst_23 {dimension_numbers = #tpu.dot_dimension_numbers<[1], [1], [0], [0], [0, 0, 1, 0], [], []>} : vector<1x4xf32>, vector<16x4xf32>, vector<1x16xf32> -> vector<1x16xf32>
    %70 = vector.broadcast %68 : vector<16x1xf32> to vector<16x16xf32>
    %71 = vector.broadcast %69 : vector<1x16xf32> to vector<16x16xf32>
    %72 = arith.addf %70, %71 : vector<16x16xf32>
    %cst_24 = arith.constant 0.000000e+00 : f32
    %73 = vector.broadcast %cst_24 : f32 to vector<16x16xf32>
    %74 = arith.cmpf oge, %72, %73 : vector<16x16xf32>
    %cst_25 = arith.constant 2.000000e-01 : f32
    %75 = vector.broadcast %cst_25 : f32 to vector<16x16xf32>
    %76 = arith.mulf %75, %72 : vector<16x16xf32>
    %77 = arith.select %74, %72, %76 : vector<16x16xi1>, vector<16x16xf32>
    %78 = arith.addf %77, %2 : vector<16x16xf32>
    %cst_26 = arith.constant dense<0xFF800000> : vector<16xf32>
    %79 = vector.multi_reduction <maximumf>, %78, %cst_26 [1] : vector<16x16xf32> to vector<16xf32>
    %80 = vector.shape_cast %79 : vector<16xf32> to vector<16x1xf32>
    %81 = vector.broadcast %80 : vector<16x1xf32> to vector<16x16xf32>
    %82 = arith.subf %78, %81 : vector<16x16xf32>
    %83 = math.exp %82 : vector<16x16xf32>
    %cst_27 = arith.constant dense<0.000000e+00> : vector<16xf32>
    %84 = vector.multi_reduction <add>, %83, %cst_27 [1] : vector<16x16xf32> to vector<16xf32>
    %85 = vector.shape_cast %84 : vector<16xf32> to vector<16x1xf32>
    %86 = arith.truncf %83 : vector<16x16xf32> to vector<16x16xbf16>
    %87 = arith.truncf %64 : vector<16x4xf32> to vector<16x4xbf16>
    %cst_28 = arith.constant dense<0.000000e+00> : vector<16x4xf32>
    %88 = tpu.matmul %86, %87, %cst_28 {dimension_numbers = #tpu.dot_dimension_numbers<[1], [0], [0], [1], [0, 0, 1, 1], [], []>} : vector<16x16xbf16>, vector<16x4xbf16>, vector<16x4xf32> -> vector<16x4xf32>
    %89 = tpu.reciprocal %85 {approx = true} : vector<16x1xf32> -> vector<16x1xf32>
    %90 = vector.broadcast %89 : vector<16x1xf32> to vector<16x4xf32>
    %91 = arith.mulf %88, %90 : vector<16x4xf32>
    %92 = vector.extract_strided_slice %3 {offsets = [0, 12], sizes = [16, 4], strides = [1, 1]} : vector<16x16xf32> to vector<16x4xf32>
    %93 = vector.extract_strided_slice %4 {offsets = [0, 12], sizes = [16, 4], strides = [1, 1]} : vector<16x16xf32> to vector<16x4xf32>
    %94 = vector.broadcast %0 : vector<1x4xf32> to vector<16x4xf32>
    %95 = arith.mulf %92, %94 : vector<16x4xf32>
    %cst_29 = arith.constant dense<0.000000e+00> : vector<16xf32>
    %96 = vector.multi_reduction <add>, %95, %cst_29 [1] : vector<16x4xf32> to vector<16xf32>
    %97 = vector.shape_cast %96 : vector<16xf32> to vector<16x1xf32>
    %cst_30 = arith.constant dense<0.000000e+00> : vector<1x16xf32>
    %98 = tpu.matmul %1, %93, %cst_30 {dimension_numbers = #tpu.dot_dimension_numbers<[1], [1], [0], [0], [0, 0, 1, 0], [], []>} : vector<1x4xf32>, vector<16x4xf32>, vector<1x16xf32> -> vector<1x16xf32>
    %99 = vector.broadcast %97 : vector<16x1xf32> to vector<16x16xf32>
    %100 = vector.broadcast %98 : vector<1x16xf32> to vector<16x16xf32>
    %101 = arith.addf %99, %100 : vector<16x16xf32>
    %cst_31 = arith.constant 0.000000e+00 : f32
    %102 = vector.broadcast %cst_31 : f32 to vector<16x16xf32>
    %103 = arith.cmpf oge, %101, %102 : vector<16x16xf32>
    %cst_32 = arith.constant 2.000000e-01 : f32
    %104 = vector.broadcast %cst_32 : f32 to vector<16x16xf32>
    %105 = arith.mulf %104, %101 : vector<16x16xf32>
    %106 = arith.select %103, %101, %105 : vector<16x16xi1>, vector<16x16xf32>
    %107 = arith.addf %106, %2 : vector<16x16xf32>
    %cst_33 = arith.constant dense<0xFF800000> : vector<16xf32>
    %108 = vector.multi_reduction <maximumf>, %107, %cst_33 [1] : vector<16x16xf32> to vector<16xf32>
    %109 = vector.shape_cast %108 : vector<16xf32> to vector<16x1xf32>
    %110 = vector.broadcast %109 : vector<16x1xf32> to vector<16x16xf32>
    %111 = arith.subf %107, %110 : vector<16x16xf32>
    %112 = math.exp %111 : vector<16x16xf32>
    %cst_34 = arith.constant dense<0.000000e+00> : vector<16xf32>
    %113 = vector.multi_reduction <add>, %112, %cst_34 [1] : vector<16x16xf32> to vector<16xf32>
    %114 = vector.shape_cast %113 : vector<16xf32> to vector<16x1xf32>
    %115 = arith.truncf %112 : vector<16x16xf32> to vector<16x16xbf16>
    %116 = arith.truncf %93 : vector<16x4xf32> to vector<16x4xbf16>
    %cst_35 = arith.constant dense<0.000000e+00> : vector<16x4xf32>
    %117 = tpu.matmul %115, %116, %cst_35 {dimension_numbers = #tpu.dot_dimension_numbers<[1], [0], [0], [1], [0, 0, 1, 1], [], []>} : vector<16x16xbf16>, vector<16x4xbf16>, vector<16x4xf32> -> vector<16x4xf32>
    %118 = tpu.reciprocal %114 {approx = true} : vector<16x1xf32> -> vector<16x1xf32>
    %119 = vector.broadcast %118 : vector<16x1xf32> to vector<16x4xf32>
    %120 = arith.mulf %117, %119 : vector<16x4xf32>
    %121 = tpu.concatenate %33, %62, %91, %120 in 1 : vector<16x4xf32>, vector<16x4xf32>, vector<16x4xf32>, vector<16x4xf32> -> vector<16x16xf32>
    %c0_36 = arith.constant 0 : index
    %c0_37 = arith.constant 0 : index
    %122 = vector.load %arg6[%c0_36, %c0_37] : memref<16x16xf32, #tpu.memory_space<vmem>>, vector<16x16xf32>
    tpu.vector_store %arg6[%c0_36, %c0_37], %121 {strides = array<i32>} : memref<16x16xf32, #tpu.memory_space<vmem>>, vector<16x16xf32>,
    return
  }
  func.func @transform_0(%arg0: i32) -> (i32, i32) {
    %c0_i32 = arith.constant 0 : i32
    %c0_i32_0 = arith.constant 0 : i32
    return %arg0, %c0_i32 : i32, i32
  }
  func.func @transform_1(%arg0: i32) -> (i32, i32) {
    %c0_i32 = arith.constant 0 : i32
    %c0_i32_0 = arith.constant 0 : i32
    %c0_i32_1 = arith.constant 0 : i32
    return %c0_i32, %c0_i32_0 : i32, i32
  }
  func.func @transform_2(%arg0: i32) -> (i32, i32) {
    %c0_i32 = arith.constant 0 : i32
    %c0_i32_0 = arith.constant 0 : i32
    %c0_i32_1 = arith.constant 0 : i32
    return %c0_i32, %c0_i32_0 : i32, i32
  }
  func.func @transform_3(%arg0: i32) -> (i32, i32) {
    %c0_i32 = arith.constant 0 : i32
    %c0_i32_0 = arith.constant 0 : i32
    %c0_i32_1 = arith.constant 0 : i32
    return %c0_i32, %c0_i32_0 : i32, i32
  }
  func.func @transform_4(%arg0: i32) -> (i32, i32) {
    %c0_i32 = arith.constant 0 : i32
    %c0_i32_0 = arith.constant 0 : i32
    return %arg0, %c0_i32 : i32, i32
  }
  func.func @transform_5(%arg0: i32) -> (i32, i32) {
    %c0_i32 = arith.constant 0 : i32
    %c0_i32_0 = arith.constant 0 : i32
    return %arg0, %c0_i32 : i32, i32
  }
}

module attributes {stable_mosaic.version = 11 : i64} {
  func.func @kernel(%arg0: i32, %arg1: memref<16x16xf32, #tpu.memory_space<vmem>>, %arg2: memref<16x4xbf16, #tpu.memory_space<vmem>>, %arg3: memref<16x4xf32, #tpu.memory_space<vmem>>) attributes {dimension_semantics = [#tpu.dimension_semantics<parallel>], iteration_bounds = array<i64: 1>, scalar_prefetch = 0 : i64, scratch_operands = 0 : i64, tpu.core_type = #tpu.core_type<tc>, window_params = [{transform_indices = @transform_0, window_bounds = array<i64: 16, 16>}, {pipeline_mode = #tpu.pipeline_mode<synchronous>, transform_indices = @transform_1, window_bounds = array<i64: 16, 4>}, {transform_indices = @transform_2, window_bounds = array<i64: 16, 4>}]} {
    %c0 = arith.constant 0 : index
    %c0_0 = arith.constant 0 : index
    %0 = vector.load %arg1[%c0, %c0_0] : memref<16x16xf32, #tpu.memory_space<vmem>>, vector<16x16xf32>
    %cst = arith.constant 0.000000e+00 : f32
    %1 = vector.broadcast %cst : f32 to vector<16x16xf32>
    %2 = arith.cmpf ogt, %0, %1 : vector<16x16xf32>
    %3 = math.exp %0 : vector<16x16xf32>
    %cst_1 = arith.constant 1.000000e+00 : f32
    %4 = vector.broadcast %cst_1 : f32 to vector<16x16xf32>
    %5 = arith.subf %3, %4 : vector<16x16xf32>
    %6 = arith.select %2, %0, %5 : vector<16x16xi1>, vector<16x16xf32>
    %7 = arith.truncf %6 : vector<16x16xf32> to vector<16x16xbf16>
    %c0_2 = arith.constant 0 : index
    %c0_3 = arith.constant 0 : index
    %8 = vector.load %arg2[%c0_2, %c0_3] : memref<16x4xbf16, #tpu.memory_space<vmem>>, vector<16x4xbf16>
    %cst_4 = arith.constant dense<0.000000e+00> : vector<16x4xf32>
    %9 = tpu.matmul %7, %8, %cst_4 {dimension_numbers = #tpu.dot_dimension_numbers<[1], [0], [0], [1], [0, 0, 1, 1], [], []>} : vector<16x16xbf16>, vector<16x4xbf16>, vector<16x4xf32> -> vector<16x4xf32>
    %c0_5 = arith.constant 0 : index
    %c0_6 = arith.constant 0 : index
    %10 = vector.load %arg3[%c0_5, %c0_6] : memref<16x4xf32, #tpu.memory_space<vmem>>, vector<16x4xf32>
    tpu.vector_store %arg3[%c0_5, %c0_6], %9 {strides = array<i32>} : memref<16x4xf32, #tpu.memory_space<vmem>>, vector<16x4xf32>,
    return
  }
  func.func @transform_0(%arg0: i32) -> (i32, i32) {
    %c0_i32 = arith.constant 0 : i32
    %c0_i32_0 = arith.constant 0 : i32
    return %arg0, %c0_i32 : i32, i32
  }
  func.func @transform_1(%arg0: i32) -> (i32, i32) {
    %c0_i32 = arith.constant 0 : i32
    %c0_i32_0 = arith.constant 0 : i32
    %c0_i32_1 = arith.constant 0 : i32
    return %c0_i32, %c0_i32_0 : i32, i32
  }
  func.func @transform_2(%arg0: i32) -> (i32, i32) {
    %c0_i32 = arith.constant 0 : i32
    %c0_i32_0 = arith.constant 0 : i32
    return %arg0, %c0_i32 : i32, i32
  }
}

module attributes {stable_mosaic.version = 11 : i64} {
  func.func @kernel(%arg0: i32, %arg1: memref<16x4xf32, #tpu.memory_space<vmem>>, %arg2: memref<16x4xf32, #tpu.memory_space<vmem>>, %arg3: memref<1x4xf32, #tpu.memory_space<vmem>>, %arg4: memref<1x4xf32, #tpu.memory_space<vmem>>, %arg5: memref<16x16xf32, #tpu.memory_space<vmem>>, %arg6: memref<16x4xf32, #tpu.memory_space<vmem>>) attributes {dimension_semantics = [#tpu.dimension_semantics<parallel>], iteration_bounds = array<i64: 1>, scalar_prefetch = 0 : i64, scratch_operands = 0 : i64, tpu.core_type = #tpu.core_type<tc>, window_params = [{transform_indices = @transform_0, window_bounds = array<i64: 16, 4>}, {pipeline_mode = #tpu.pipeline_mode<synchronous>, transform_indices = @transform_1, window_bounds = array<i64: 16, 4>}, {pipeline_mode = #tpu.pipeline_mode<synchronous>, transform_indices = @transform_2, window_bounds = array<i64: 1, 4>}, {pipeline_mode = #tpu.pipeline_mode<synchronous>, transform_indices = @transform_3, window_bounds = array<i64: 1, 4>}, {transform_indices = @transform_4, window_bounds = array<i64: 16, 16>}, {transform_indices = @transform_5, window_bounds = array<i64: 16, 4>}]} {
    %c0 = arith.constant 0 : index
    %c0_0 = arith.constant 0 : index
    %0 = vector.load %arg3[%c0, %c0_0] : memref<1x4xf32, #tpu.memory_space<vmem>>, vector<1x4xf32>
    %c0_1 = arith.constant 0 : index
    %c0_2 = arith.constant 0 : index
    %1 = vector.load %arg4[%c0_1, %c0_2] : memref<1x4xf32, #tpu.memory_space<vmem>>, vector<1x4xf32>
    %c0_3 = arith.constant 0 : index
    %c0_4 = arith.constant 0 : index
    %2 = vector.load %arg5[%c0_3, %c0_4] : memref<16x16xf32, #tpu.memory_space<vmem>>, vector<16x16xf32>
    %c0_5 = arith.constant 0 : index
    %c0_6 = arith.constant 0 : index
    %3 = vector.load %arg1[%c0_5, %c0_6] : memref<16x4xf32, #tpu.memory_space<vmem>>, vector<16x4xf32>
    %c0_7 = arith.constant 0 : index
    %c0_8 = arith.constant 0 : index
    %4 = vector.load %arg2[%c0_7, %c0_8] : memref<16x4xf32, #tpu.memory_space<vmem>>, vector<16x4xf32>
    %5 = vector.broadcast %0 : vector<1x4xf32> to vector<16x4xf32>
    %6 = arith.mulf %3, %5 : vector<16x4xf32>
    %cst = arith.constant dense<0.000000e+00> : vector<16xf32>
    %7 = vector.multi_reduction <add>, %6, %cst [1] : vector<16x4xf32> to vector<16xf32>
    %8 = vector.shape_cast %7 : vector<16xf32> to vector<16x1xf32>
    %cst_9 = arith.constant dense<0.000000e+00> : vector<1x16xf32>
    %9 = tpu.matmul %1, %4, %cst_9 {dimension_numbers = #tpu.dot_dimension_numbers<[1], [1], [0], [0], [0, 0, 1, 0], [], []>} : vector<1x4xf32>, vector<16x4xf32>, vector<1x16xf32> -> vector<1x16xf32>
    %10 = vector.broadcast %8 : vector<16x1xf32> to vector<16x16xf32>
    %11 = vector.broadcast %9 : vector<1x16xf32> to vector<16x16xf32>
    %12 = arith.addf %10, %11 : vector<16x16xf32>
    %cst_10 = arith.constant 0.000000e+00 : f32
    %13 = vector.broadcast %cst_10 : f32 to vector<16x16xf32>
    %14 = arith.cmpf oge, %12, %13 : vector<16x16xf32>
    %cst_11 = arith.constant 2.000000e-01 : f32
    %15 = vector.broadcast %cst_11 : f32 to vector<16x16xf32>
    %16 = arith.mulf %15, %12 : vector<16x16xf32>
    %17 = arith.select %14, %12, %16 : vector<16x16xi1>, vector<16x16xf32>
    %18 = arith.addf %17, %2 : vector<16x16xf32>
    %cst_12 = arith.constant dense<0xFF800000> : vector<16xf32>
    %19 = vector.multi_reduction <maximumf>, %18, %cst_12 [1] : vector<16x16xf32> to vector<16xf32>
    %20 = vector.shape_cast %19 : vector<16xf32> to vector<16x1xf32>
    %21 = vector.broadcast %20 : vector<16x1xf32> to vector<16x16xf32>
    %22 = arith.subf %18, %21 : vector<16x16xf32>
    %23 = math.exp %22 : vector<16x16xf32>
    %cst_13 = arith.constant dense<0.000000e+00> : vector<16xf32>
    %24 = vector.multi_reduction <add>, %23, %cst_13 [1] : vector<16x16xf32> to vector<16xf32>
    %25 = vector.shape_cast %24 : vector<16xf32> to vector<16x1xf32>
    %26 = arith.truncf %23 : vector<16x16xf32> to vector<16x16xbf16>
    %27 = arith.truncf %4 : vector<16x4xf32> to vector<16x4xbf16>
    %cst_14 = arith.constant dense<0.000000e+00> : vector<16x4xf32>
    %28 = tpu.matmul %26, %27, %cst_14 {dimension_numbers = #tpu.dot_dimension_numbers<[1], [0], [0], [1], [0, 0, 1, 1], [], []>} : vector<16x16xbf16>, vector<16x4xbf16>, vector<16x4xf32> -> vector<16x4xf32>
    %29 = tpu.reciprocal %25 {approx = true} : vector<16x1xf32> -> vector<16x1xf32>
    %30 = vector.broadcast %29 : vector<16x1xf32> to vector<16x4xf32>
    %31 = arith.mulf %28, %30 : vector<16x4xf32>
    %c0_15 = arith.constant 0 : index
    %c0_16 = arith.constant 0 : index
    %32 = vector.load %arg6[%c0_15, %c0_16] : memref<16x4xf32, #tpu.memory_space<vmem>>, vector<16x4xf32>
    tpu.vector_store %arg6[%c0_15, %c0_16], %31 {strides = array<i32>} : memref<16x4xf32, #tpu.memory_space<vmem>>, vector<16x4xf32>,
    return
  }
  func.func @transform_0(%arg0: i32) -> (i32, i32) {
    %c0_i32 = arith.constant 0 : i32
    %c0_i32_0 = arith.constant 0 : i32
    return %arg0, %c0_i32 : i32, i32
  }
  func.func @transform_1(%arg0: i32) -> (i32, i32) {
    %c0_i32 = arith.constant 0 : i32
    %c0_i32_0 = arith.constant 0 : i32
    %c0_i32_1 = arith.constant 0 : i32
    return %c0_i32, %c0_i32_0 : i32, i32
  }
  func.func @transform_2(%arg0: i32) -> (i32, i32) {
    %c0_i32 = arith.constant 0 : i32
    %c0_i32_0 = arith.constant 0 : i32
    %c0_i32_1 = arith.constant 0 : i32
    return %c0_i32, %c0_i32_0 : i32, i32
  }
  func.func @transform_3(%arg0: i32) -> (i32, i32) {
    %c0_i32 = arith.constant 0 : i32
    %c0_i32_0 = arith.constant 0 : i32
    %c0_i32_1 = arith.constant 0 : i32
    return %c0_i32, %c0_i32_0 : i32, i32
  }
  func.func @transform_4(%arg0: i32) -> (i32, i32) {
    %c0_i32 = arith.constant 0 : i32
    %c0_i32_0 = arith.constant 0 : i32
    return %arg0, %c0_i32 : i32, i32
  }
  func.func @transform_5(%arg0: i32) -> (i32, i32) {
    %c0_i32 = arith.constant 0 : i32
    %c0_i32_0 = arith.constant 0 : i32
    return %arg0, %c0_i32 : i32, i32
  }
}

</mosaic_0001>

<llo_original>
// kernel: gatnet_forward.4
$region0: #{gatnet_forward.4}
  #allocation0 [shape = 'u32[]', space=smem, size = 0x4, offset = 0x4, fixed_abs, tag = 'smem constant byte address 0x4 - core index']
  #allocation1 [shape = 'u32[144,128]{1,0:T(1,128)}', space=vmem, size = 0x12000, scoped, tag = 'internal scratch']
  %s0 = inlined_call_operand.vmem [shape: f32[16,8], index: 0, kind: input, shape index: {}]
  %s1 = inlined_call_operand.vmem [shape: bf16[8,16], index: 1, kind: input, shape index: {}]
  %s2 = inlined_call_operand.vmem [shape: f32[16,16], index: 2, kind: output, shape index: {}]
  %s3 = sld [smem:[#allocation0]]
  $region18: #{gatnet_forward.4} parent=0
    _
  %s5 = ssub.s32 1, %s3
  %s6 = scalar_select 0, %s5, %s3
  // Predicated region
  $region2: #{gatnet_forward.4} parent=0 // pred_check
    _
  $region3: #{gatnet_forward.4} parent=0 // pred_check_branch
    %8 = sbr.rel (0) target = $region5
  $region4: #{gatnet_forward.4} parent=0 // pred_region
    _
  $region5: #{gatnet_forward.4} parent=0 // pred_fallthru
    _
  // Predicated region
  $region6: #{gatnet_forward.4} parent=0 // pred_check
    _
  $region7: #{gatnet_forward.4} parent=0 // pred_check_branch
    %10 = sbr.rel (0) target = $region9
  $region8: #{gatnet_forward.4} parent=0 // pred_region
    _
  $region9: #{gatnet_forward.4} parent=0 // pred_fallthru
    _
  %v12 = vld [vmem:[%s0] sm:$0xff]
  %v13 = vld [vmem:[%s0 + $0x8] sm:$0xff]
  %v14 = vpack.c.bf16 %v13, %v12
  %v15 = vld [vmem:[%s1] sm:$0xf]
  %vm16 = vcmask 64512
  %v18 = vsel %vm16, %v14, 0
  %vm20 = vcmask 1043456
  %v22 = vsel %vm20, %v15, 0
  %24 = vmatprep.subr.bf16.mxu0 0
  %25 = vmatpush1.bf16.msra.mxu0 %v22
  %26 = vmatprep.subr.bf16.mxu0 0
  %27 = vmatpush1.bf16.msra.mxu0 0
  %28 = vmatprep.subr.bf16.mxu0 0
  %29 = vmatpush1.bf16.msra.mxu0 0
  %30 = vmatprep.subr.bf16.mxu0 0
  %31 = vmatpush1.bf16.msra.mxu0 0
  %32 = vmatprep.subr.bf16.mxu0 0
  %33 = vmatpush1.bf16.msra.mxu0 0
  %34 = vmatprep.subr.bf16.mxu0 0
  %35 = vmatpush1.bf16.msra.mxu0 0
  %36 = vmatprep.subr.bf16.mxu0 0
  %37 = vmatpush1.bf16.msra.mxu0 0
  %38 = vmatprep.subr.bf16.mxu0 0
  %39 = vmatpush1.bf16.msra.mxu0 0
  %40 = vmatprep.subr.bf16.mxu0 0
  %41 = vmatpush1.bf16.msra.mxu0 0
  %42 = vmatprep.subr.bf16.mxu0 0
  %43 = vmatpush1.bf16.msra.mxu0 0
  %44 = vmatprep.subr.bf16.mxu0 0
  %45 = vmatpush1.bf16.msra.mxu0 0
  %46 = vmatprep.subr.bf16.mxu0 0
  %47 = vmatpush1.bf16.msra.mxu0 0
  %48 = vmatprep.subr.bf16.mxu0 0
  %49 = vmatpush1.bf16.msra.mxu0 0
  %50 = vmatprep.subr.bf16.mxu0 0
  %51 = vmatpush1.bf16.msra.mxu0 0
  %52 = vmatprep.subr.bf16.mxu0 0
  %53 = vmatpush1.bf16.msra.mxu0 0
  %54 = vmatprep.subr.bf16.mxu0 0
  %55 = vmatpush1.bf16.msra.mxu0 0
  %56 = vmatprep.mubr.bf16.mxu0 0
  %57 = vmatmul.mubr.bf16.gmra.mrb[0].mxu0 %v18
  %v58 = vpop.f32.mrb[0].mxu0
  %v59 = vadd.f32 0.0, %v58
  %v60 = vpop.f32.mrb[0].mxu0
  %v61 = vpop.f32.mrb[0].mxu0
  %v62 = vadd.f32 0.0, %v61
  %v63 = vpop.f32.mrb[0].mxu0
  %64 = vdwg.mxu0
  %vm65 = vcmask 130048
  %66 = vst.msk [vmem:[%s2] sm:$0xff] %vm65, %v59
  %67 = vst.msk [vmem:[%s2 + $0x8] sm:$0xff] %vm65, %v62
  // Predicated region
  $region10: #{gatnet_forward.4} parent=0 // pred_check
    _
  $region11: #{gatnet_forward.4} parent=0 // pred_check_branch
    %69 = sbr.rel (0) target = $region13
  $region12: #{gatnet_forward.4} parent=0 // pred_region
    _
  $region13: #{gatnet_forward.4} parent=0 // pred_fallthru
    _
  // Predicated region
  $region14: #{gatnet_forward.4} parent=0 // pred_check
    _
  $region15: #{gatnet_forward.4} parent=0 // pred_check_branch
    %71 = sbr.rel (0) target = $region17
  $region16: #{gatnet_forward.4} parent=0 // pred_region
    _
  $region17: #{gatnet_forward.4} parent=0 // pred_fallthru
    _

// kernel: gatnet_forward.5
$region0: #{gatnet_forward.5}
  #allocation0 [shape = 'u32[]', space=smem, size = 0x4, offset = 0x4, fixed_abs, tag = 'smem constant byte address 0x4 - core index']
  #allocation1 [shape = 'u32[144,128]{1,0:T(1,128)}', space=vmem, size = 0x12000, scoped, tag = 'internal scratch']
  %s0 = inlined_call_operand.vmem [shape: f32[16,16], index: 0, kind: input, shape index: {}, may-alias: {0,1}]
  %s1 = inlined_call_operand.vmem [shape: f32[16,16], index: 1, kind: input, shape index: {}, may-alias: {0,1}]
  %s2 = inlined_call_operand.vmem [shape: f32[1,4], index: 2, kind: input, shape index: {}]
  %s3 = inlined_call_operand.vmem [shape: f32[1,4], index: 3, kind: input, shape index: {}]
  %s4 = inlined_call_operand.vmem [shape: f32[16,16], index: 4, kind: input, shape index: {}]
  %s5 = inlined_call_operand.vmem [shape: f32[16,16], index: 5, kind: output, shape index: {}]
  %s6 = sld [smem:[#allocation0]]
  $region30: #{gatnet_forward.5} parent=0
    _
  %s8 = ssub.s32 1, %s6
  %s9 = scalar_select 0, %s8, %s6
  // Predicated region
  $region2: #{gatnet_forward.5} parent=0 // pred_check
    _
  $region3: #{gatnet_forward.5} parent=0 // pred_check_branch
    %11 = sbr.rel (0) target = $region5
  $region4: #{gatnet_forward.5} parent=0 // pred_region
    _
  $region5: #{gatnet_forward.5} parent=0 // pred_fallthru
    _
  // Predicated region
  $region6: #{gatnet_forward.5} parent=0 // pred_check
    _
  $region7: #{gatnet_forward.5} parent=0 // pred_check_branch
    %13 = sbr.rel (0) target = $region9
  $region8: #{gatnet_forward.5} parent=0 // pred_region
    _
  $region9: #{gatnet_forward.5} parent=0 // pred_fallthru
    _
  // Predicated region
  $region10: #{gatnet_forward.5} parent=0 // pred_check
    _
  $region11: #{gatnet_forward.5} parent=0 // pred_check_branch
    %15 = sbr.rel (0) target = $region13
  $region12: #{gatnet_forward.5} parent=0 // pred_region
    _
  $region13: #{gatnet_forward.5} parent=0 // pred_fallthru
    _
  // Predicated region
  $region14: #{gatnet_forward.5} parent=0 // pred_check
    _
  $region15: #{gatnet_forward.5} parent=0 // pred_check_branch
    %17 = sbr.rel (0) target = $region17
  $region16: #{gatnet_forward.5} parent=0 // pred_region
    _
  $region17: #{gatnet_forward.5} parent=0 // pred_fallthru
    _
  // Predicated region
  $region18: #{gatnet_forward.5} parent=0 // pred_check
    _
  $region19: #{gatnet_forward.5} parent=0 // pred_check_branch
    %19 = sbr.rel (0) target = $region21
  $region20: #{gatnet_forward.5} parent=0 // pred_region
    _
  $region21: #{gatnet_forward.5} parent=0 // pred_fallthru
    _
  %v21 = vld [vmem:[%s2] sm:$0x1]
  %v22 = vld [vmem:[%s3] sm:$0x1]
  %v23 = vld [vmem:[%s4] sm:$0xff]
  %v24 = vld [vmem:[%s4 + $0x8] sm:$0xff]
  %v25 = vld [vmem:[%s0] sm:$0xff]
  %v26 = vld [vmem:[%s0 + $0x8] sm:$0xff]
  %v27 = vld [vmem:[%s1] sm:$0xff]
  %v28 = vld [vmem:[%s1 + $0x8] sm:$0xff]
  %v30 = vlaneseq
  %v31 = vshrl.u32 %v30, 7
  %v32 = vsub.s32 0, %v31
  %v33 = vrot.slane %v21, %v32
  %v35 = vmul.f32 %v25, %v33
  %v36 = vmul.f32 %v26, %v33
  %vm37 = vcmask 31744
  %v38 = vsel %vm37, %v35, 0.0
  %39 = vadd.xlane.f32.xlu0 %v38
  %v40 = vpop.xlane.xlu0 %39
  %v41 = vsel %vm37, %v36, 0.0
  %42 = vadd.xlane.f32.xlu0 %v41
  %v43 = vpop.xlane.xlu0 %42
  %v45 = vsel %vm37, %v22, 0
  %v48 = vsel %vm37, %v27, 0
  %v51 = vsel %vm37, %v28, 0
  %53 = vmatprep.subr.mxu0 0.0
  %54 = vmatpush1.xpose.msra.mxu0 %v48
  %55 = vmatprep.subr.mxu0 0.0
  %56 = vmatpush1.xpose.msra.mxu0 %v51
  %57 = vmatprep.subr.mxu0 0.0
  %58 = vmatpush1.xpose.msra.mxu0 0.0
  %59 = vmatprep.subr.mxu0 0.0
  %60 = vmatpush1.xpose.msra.mxu0 0.0
  %61 = vmatprep.subr.mxu0 0.0
  %62 = vmatpush1.xpose.msra.mxu0 0.0
  %63 = vmatprep.subr.mxu0 0.0
  %64 = vmatpush1.xpose.msra.mxu0 0.0
  %65 = vmatprep.subr.mxu0 0.0
  %66 = vmatpush1.xpose.msra.mxu0 0.0
  %67 = vmatprep.subr.mxu0 0.0
  %68 = vmatpush1.xpose.msra.mxu0 0.0
  %69 = vmatprep.subr.mxu0 0.0
  %70 = vmatpush1.xpose.msra.mxu0 0.0
  %71 = vmatprep.subr.mxu0 0.0
  %72 = vmatpush1.xpose.msra.mxu0 0.0
  %73 = vmatprep.subr.mxu0 0.0
  %74 = vmatpush1.xpose.msra.mxu0 0.0
  %75 = vmatprep.subr.mxu0 0.0
  %76 = vmatpush1.xpose.msra.mxu0 0.0
  %77 = vmatprep.subr.mxu0 0.0
  %78 = vmatpush1.xpose.msra.mxu0 0.0
  %79 = vmatprep.subr.mxu0 0.0
  %80 = vmatpush1.xpose.msra.mxu0 0.0
  %81 = vmatprep.subr.mxu0 0.0
  %82 = vmatpush1.xpose.msra.mxu0 0.0
  %83 = vmatprep.subr.mxu0 0.0
  %84 = vmatpush1.xpose.msra.mxu0 0.0
  %85 = vmatprep.subr.mxu0 0.0
  %86 = vmatpush1.xpose.msra.mxu0 0.0
  %87 = vmatprep.subr.mxu0 0.0
  %88 = vmatpush1.xpose.msra.mxu0 0.0
  %89 = vmatprep.subr.mxu0 0.0
  %90 = vmatpush1.xpose.msra.mxu0 0.0
  %91 = vmatprep.subr.mxu0 0.0
  %92 = vmatpush1.xpose.msra.mxu0 0.0
  %93 = vmatprep.subr.mxu0 0.0
  %94 = vmatpush1.xpose.msra.mxu0 0.0
  %95 = vmatprep.subr.mxu0 0.0
  %96 = vmatpush1.xpose.msra.mxu0 0.0
  %97 = vmatprep.subr.mxu0 0.0
  %98 = vmatpush1.xpose.msra.mxu0 0.0
  %99 = vmatprep.subr.mxu0 0.0
  %100 = vmatpush1.xpose.msra.mxu0 0.0
  %101 = vmatprep.subr.mxu0 0.0
  %102 = vmatpush1.xpose.msra.mxu0 0.0
  %103 = vmatprep.subr.mxu0 0.0
  %104 = vmatpush1.xpose.msra.mxu0 0.0
  %105 = vmatprep.subr.mxu0 0.0
  %106 = vmatpush1.xpose.msra.mxu0 0.0
  %107 = vmatprep.subr.mxu0 0.0
  %108 = vmatpush1.xpose.msra.mxu0 0.0
  %109 = vmatprep.subr.mxu0 0.0
  %110 = vmatpush1.xpose.msra.mxu0 0.0
  %111 = vmatprep.subr.mxu0 0.0
  %112 = vmatpush1.xpose.msra.mxu0 0.0
  %113 = vmatprep.subr.mxu0 0.0
  %114 = vmatpush1.xpose.msra.mxu0 0.0
  %115 = vmatprep.subr.mxu0 0.0
  %116 = vmatpush1.xpose.msra.mxu0 0.0
  %117 = vmatprep.mubr.f32.mxu0 0.0
  %118 = vmatmul.mubr.f32.gmra.mrb[0].mxu0 %v45
  %v119 = vpop.f32.mrb[0].mxu0
  %v120 = vadd.f32 0.0, %v119
  %v121 = vpop.f32.mrb[0].mxu0
  %122 = vdwg.mxu0
  %v123 = vlaneseq
  %v124 = vshrl.u32 %v123, 7
  %v125 = vsub.s32 0, %v124
  %v126 = vrot.slane %v120, %v125
  %v127 = vadd.f32 %v40, %v126
  %v128 = vadd.f32 %v43, %v126
  %vm129 = vcmp.ge.f32.partialorder %v127, 0.0
  %vm130 = vcmp.ge.f32.partialorder %v128, 0.0
  %v131 = vmul.f32 %v127, 0.2
  %v132 = vmul.f32 %v128, 0.2
  %v133 = vsel %vm129, %v127, %v131
  %v134 = vsel %vm130, %v128, %v132
  %v135 = vadd.f32 %v133, %v23
  %v136 = vadd.f32 %v134, %v24
  %vm137 = vcmask 130048
  %v138 = vsel %vm137, %v135, -inf
  %139 = vmax.xlane.f32.xlu0 %v138
  %v140 = vpop.xlane.xlu0 %139
  %v141 = vsel %vm137, %v136, -inf
  %142 = vmax.xlane.f32.xlu0 %v141
  %v143 = vpop.xlane.xlu0 %142
  %v144 = vsub.f32 %v135, %v140
  %v145 = vsub.f32 %v136, %v143
  %v146 = vmul.f32 %v144, 1.442695
  %v147 = vpow.pop %v146
  %v148 = vmul.f32 %v145, 1.442695
  %v149 = vpow.pop %v148
  %v150 = vsel %vm137, %v147, 0.0
  %151 = vadd.xlane.f32.xlu0 %v150
  %v152 = vpop.xlane.xlu0 %151
  %v153 = vsel %vm137, %v149, 0.0
  %154 = vadd.xlane.f32.xlu0 %v153
  %v155 = vpop.xlane.xlu0 %154
  %v156 = vpack.c.bf16 %v149, %v147
  %v157 = vpack.c.bf16 %v28, %v27
  %v159 = vsel %vm137, %v156, 0
  %161 = vmatprep.subr.bf16.mxu0 0
  %162 = vmatpush1.bf16.msra.mxu0 %v157
  %163 = vmatprep.subr.bf16.mxu0 0
  %164 = vmatpush1.bf16.msra.mxu0 0
  %165 = vmatprep.subr.bf16.mxu0 0
  %166 = vmatpush1.bf16.msra.mxu0 0
  %167 = vmatprep.subr.bf16.mxu0 0
  %168 = vmatpush1.bf16.msra.mxu0 0
  %169 = vmatprep.subr.bf16.mxu0 0
  %170 = vmatpush1.bf16.msra.mxu0 0
  %171 = vmatprep.subr.bf16.mxu0 0
  %172 = vmatpush1.bf16.msra.mxu0 0
  %173 = vmatprep.subr.bf16.mxu0 0
  %174 = vmatpush1.bf16.msra.mxu0 0
  %175 = vmatprep.subr.bf16.mxu0 0
  %176 = vmatpush1.bf16.msra.mxu0 0
  %177 = vmatprep.subr.bf16.mxu0 0
  %178 = vmatpush1.bf16.msra.mxu0 0
  %179 = vmatprep.subr.bf16.mxu0 0
  %180 = vmatpush1.bf16.msra.mxu0 0
  %181 = vmatprep.subr.bf16.mxu0 0
  %182 = vmatpush1.bf16.msra.mxu0 0
  %183 = vmatprep.subr.bf16.mxu0 0
  %184 = vmatpush1.bf16.msra.mxu0 0
  %185 = vmatprep.subr.bf16.mxu0 0
  %186 = vmatpush1.bf16.msra.mxu0 0
  %187 = vmatprep.subr.bf16.mxu0 0
  %188 = vmatpush1.bf16.msra.mxu0 0
  %189 = vmatprep.subr.bf16.mxu0 0
  %190 = vmatpush1.bf16.msra.mxu0 0
  %191 = vmatprep.subr.bf16.mxu0 0
  %192 = vmatpush1.bf16.msra.mxu0 0
  %193 = vmatprep.mubr.bf16.mxu0 0
  %194 = vmatmul.mubr.bf16.gmra.mrb[0].mxu0 %v159
  %v195 = vpop.f32.mrb[0].mxu0
  %v196 = vadd.f32 0.0, %v195
  %v197 = vpop.f32.mrb[0].mxu0
  %v198 = vpop.f32.mrb[0].mxu0
  %v199 = vadd.f32 0.0, %v198
  %v200 = vpop.f32.mrb[0].mxu0
  %201 = vdwg.mxu0
  %v202 = vrcp.pop %v152
  %v203 = vrcp.pop %v155
  %v204 = vmul.f32 %v196, %v202
  %v205 = vmul.f32 %v199, %v203
  %206 = vrot.lane.b32.xlu0 %v33, 4
  %v207 = vpop.permute.xlu0 %206
  %v209 = vmul.f32 %v25, %v207
  %v210 = vmul.f32 %v26, %v207
  %213 = vrot.lane.b32.xlu0 %v209, 124
  %v214 = vpop.permute.xlu0 %213
  %215 = vrot.lane.b32.xlu0 %v210, 124
  %v216 = vpop.permute.xlu0 %215
  %v219 = vsel %vm37, %v214, 0.0
  %220 = vadd.xlane.f32.xlu0 %v219
  %v221 = vpop.xlane.xlu0 %220
  %v222 = vsel %vm37, %v216, 0.0
  %223 = vadd.xlane.f32.xlu0 %v222
  %v224 = vpop.xlane.xlu0 %223
  %225 = vrot.lane.b32.xlu0 %v27, 124
  %v226 = vpop.permute.xlu0 %225
  %227 = vrot.lane.b32.xlu0 %v28, 124
  %v228 = vpop.permute.xlu0 %227
  %v229 = vsel %vm37, %v226, 0
  %v231 = vsel %vm37, %v228, 0
  %233 = vmatprep.subr.mxu0 0.0
  %234 = vmatpush1.xpose.msra.mxu0 %v229
  %235 = vmatprep.subr.mxu0 0.0
  %236 = vmatpush1.xpose.msra.mxu0 %v231
  %237 = vmatprep.subr.mxu0 0.0
  %238 = vmatpush1.xpose.msra.mxu0 0.0
  %239 = vmatprep.subr.mxu0 0.0
  %240 = vmatpush1.xpose.msra.mxu0 0.0
  %241 = vmatprep.subr.mxu0 0.0
  %242 = vmatpush1.xpose.msra.mxu0 0.0
  %243 = vmatprep.subr.mxu0 0.0
  %244 = vmatpush1.xpose.msra.mxu0 0.0
  %245 = vmatprep.subr.mxu0 0.0
  %246 = vmatpush1.xpose.msra.mxu0 0.0
  %247 = vmatprep.subr.mxu0 0.0
  %248 = vmatpush1.xpose.msra.mxu0 0.0
  %249 = vmatprep.subr.mxu0 0.0
  %250 = vmatpush1.xpose.msra.mxu0 0.0
  %251 = vmatprep.subr.mxu0 0.0
  %252 = vmatpush1.xpose.msra.mxu0 0.0
  %253 = vmatprep.subr.mxu0 0.0
  %254 = vmatpush1.xpose.msra.mxu0 0.0
  %255 = vmatprep.subr.mxu0 0.0
  %256 = vmatpush1.xpose.msra.mxu0 0.0
  %257 = vmatprep.subr.mxu0 0.0
  %258 = vmatpush1.xpose.msra.mxu0 0.0
  %259 = vmatprep.subr.mxu0 0.0
  %260 = vmatpush1.xpose.msra.mxu0 0.0
  %261 = vmatprep.subr.mxu0 0.0
  %262 = vmatpush1.xpose.msra.mxu0 0.0
  %263 = vmatprep.subr.mxu0 0.0
  %264 = vmatpush1.xpose.msra.mxu0 0.0
  %265 = vmatprep.subr.mxu0 0.0
  %266 = vmatpush1.xpose.msra.mxu0 0.0
  %267 = vmatprep.subr.mxu0 0.0
  %268 = vmatpush1.xpose.msra.mxu0 0.0
  %269 = vmatprep.subr.mxu0 0.0
  %270 = vmatpush1.xpose.msra.mxu0 0.0
  %271 = vmatprep.subr.mxu0 0.0
  %272 = vmatpush1.xpose.msra.mxu0 0.0
  %273 = vmatprep.subr.mxu0 0.0
  %274 = vmatpush1.xpose.msra.mxu0 0.0
  %275 = vmatprep.subr.mxu0 0.0
  %276 = vmatpush1.xpose.msra.mxu0 0.0
  %277 = vmatprep.subr.mxu0 0.0
  %278 = vmatpush1.xpose.msra.mxu0 0.0
  %279 = vmatprep.subr.mxu0 0.0
  %280 = vmatpush1.xpose.msra.mxu0 0.0
  %281 = vmatprep.subr.mxu0 0.0
  %282 = vmatpush1.xpose.msra.mxu0 0.0
  %283 = vmatprep.subr.mxu0 0.0
  %284 = vmatpush1.xpose.msra.mxu0 0.0
  %285 = vmatprep.subr.mxu0 0.0
  %286 = vmatpush1.xpose.msra.mxu0 0.0
  %287 = vmatprep.subr.mxu0 0.0
  %288 = vmatpush1.xpose.msra.mxu0 0.0
  %289 = vmatprep.subr.mxu0 0.0
  %290 = vmatpush1.xpose.msra.mxu0 0.0
  %291 = vmatprep.subr.mxu0 0.0
  %292 = vmatpush1.xpose.msra.mxu0 0.0
  %293 = vmatprep.subr.mxu0 0.0
  %294 = vmatpush1.xpose.msra.mxu0 0.0
  %295 = vmatprep.subr.mxu0 0.0
  %296 = vmatpush1.xpose.msra.mxu0 0.0
  %297 = vmatprep.mubr.f32.mxu0 0.0
  %298 = vmatmul.mubr.f32.gmra.mrb[0].mxu0 %v45
  %v299 = vpop.f32.mrb[0].mxu0
  %v300 = vadd.f32 0.0, %v299
  %v301 = vpop.f32.mrb[0].mxu0
  %302 = vdwg.mxu0
  %v303 = vlaneseq
  %v304 = vshrl.u32 %v303, 7
  %v305 = vsub.s32 0, %v304
  %v306 = vrot.slane %v300, %v305
  %v307 = vadd.f32 %v221, %v306
  %v308 = vadd.f32 %v224, %v306
  %vm309 = vcmp.ge.f32.partialorder %v307, 0.0
  %vm310 = vcmp.ge.f32.partialorder %v308, 0.0
  %v311 = vmul.f32 %v307, 0.2
  %v312 = vmul.f32 %v308, 0.2
  %v313 = vsel %vm309, %v307, %v311
  %v314 = vsel %vm310, %v308, %v312
  %v315 = vadd.f32 %v313, %v23
  %v316 = vadd.f32 %v314, %v24
  %v317 = vsel %vm137, %v315, -inf
  %318 = vmax.xlane.f32.xlu0 %v317
  %v319 = vpop.xlane.xlu0 %318
  %v320 = vsel %vm137, %v316, -inf
  %321 = vmax.xlane.f32.xlu0 %v320
  %v322 = vpop.xlane.xlu0 %321
  %v323 = vsub.f32 %v315, %v319
  %v324 = vsub.f32 %v316, %v322
  %v325 = vmul.f32 %v323, 1.442695
  %v326 = vpow.pop %v325
  %v327 = vmul.f32 %v324, 1.442695
  %v328 = vpow.pop %v327
  %v329 = vsel %vm137, %v326, 0.0
  %330 = vadd.xlane.f32.xlu0 %v329
  %v331 = vpop.xlane.xlu0 %330
  %v332 = vsel %vm137, %v328, 0.0
  %333 = vadd.xlane.f32.xlu0 %v332
  %v334 = vpop.xlane.xlu0 %333
  %v335 = vpack.c.bf16 %v328, %v326
  %337 = vrot.lane.b32.xlu0 %v157, 124
  %v338 = vpop.permute.xlu0 %337
  %v341 = vsel %vm137, %v335, 0
  %343 = vmatprep.subr.bf16.mxu0 0
  %344 = vmatpush1.bf16.msra.mxu0 %v338
  %345 = vmatprep.subr.bf16.mxu0 0
  %346 = vmatpush1.bf16.msra.mxu0 0
  %347 = vmatprep.subr.bf16.mxu0 0
  %348 = vmatpush1.bf16.msra.mxu0 0
  %349 = vmatprep.subr.bf16.mxu0 0
  %350 = vmatpush1.bf16.msra.mxu0 0
  %351 = vmatprep.subr.bf16.mxu0 0
  %352 = vmatpush1.bf16.msra.mxu0 0
  %353 = vmatprep.subr.bf16.mxu0 0
  %354 = vmatpush1.bf16.msra.mxu0 0
  %355 = vmatprep.subr.bf16.mxu0 0
  %356 = vmatpush1.bf16.msra.mxu0 0
  %357 = vmatprep.subr.bf16.mxu0 0
  %358 = vmatpush1.bf16.msra.mxu0 0
  %359 = vmatprep.subr.bf16.mxu0 0
  %360 = vmatpush1.bf16.msra.mxu0 0
  %361 = vmatprep.subr.bf16.mxu0 0
  %362 = vmatpush1.bf16.msra.mxu0 0
  %363 = vmatprep.subr.bf16.mxu0 0
  %364 = vmatpush1.bf16.msra.mxu0 0
  %365 = vmatprep.subr.bf16.mxu0 0
  %366 = vmatpush1.bf16.msra.mxu0 0
  %367 = vmatprep.subr.bf16.mxu0 0
  %368 = vmatpush1.bf16.msra.mxu0 0
  %369 = vmatprep.subr.bf16.mxu0 0
  %370 = vmatpush1.bf16.msra.mxu0 0
  %371 = vmatprep.subr.bf16.mxu0 0
  %372 = vmatpush1.bf16.msra.mxu0 0
  %373 = vmatprep.subr.bf16.mxu0 0
  %374 = vmatpush1.bf16.msra.mxu0 0
  %375 = vmatprep.mubr.bf16.mxu0 0
  %376 = vmatmul.mubr.bf16.gmra.mrb[0].mxu0 %v341
  %v377 = vpop.f32.mrb[0].mxu0
  %v378 = vadd.f32 0.0, %v377
  %v379 = vpop.f32.mrb[0].mxu0
  %v380 = vpop.f32.mrb[0].mxu0
  %v381 = vadd.f32 0.0, %v380
  %v382 = vpop.f32.mrb[0].mxu0
  %383 = vdwg.mxu0
  %v384 = vrcp.pop %v331
  %v385 = vrcp.pop %v334
  %v386 = vmul.f32 %v378, %v384
  %v387 = vmul.f32 %v381, %v385
  %388 = vrot.lane.b32.xlu0 %v33, 8
  %v389 = vpop.permute.xlu0 %388
  %v391 = vmul.f32 %v25, %v389
  %v392 = vmul.f32 %v26, %v389
  %395 = vrot.lane.b32.xlu0 %v391, 120
  %v396 = vpop.permute.xlu0 %395
  %397 = vrot.lane.b32.xlu0 %v392, 120
  %v398 = vpop.permute.xlu0 %397
  %v401 = vsel %vm37, %v396, 0.0
  %402 = vadd.xlane.f32.xlu0 %v401
  %v403 = vpop.xlane.xlu0 %402
  %v404 = vsel %vm37, %v398, 0.0
  %405 = vadd.xlane.f32.xlu0 %v404
  %v406 = vpop.xlane.xlu0 %405
  %407 = vrot.lane.b32.xlu0 %v27, 120
  %v408 = vpop.permute.xlu0 %407
  %409 = vrot.lane.b32.xlu0 %v28, 120
  %v410 = vpop.permute.xlu0 %409
  %v411 = vsel %vm37, %v408, 0
  %v413 = vsel %vm37, %v410, 0
  %415 = vmatprep.subr.mxu0 0.0
  %416 = vmatpush1.xpose.msra.mxu0 %v411
  %417 = vmatprep.subr.mxu0 0.0
  %418 = vmatpush1.xpose.msra.mxu0 %v413
  %419 = vmatprep.subr.mxu0 0.0
  %420 = vmatpush1.xpose.msra.mxu0 0.0
  %421 = vmatprep.subr.mxu0 0.0
  %422 = vmatpush1.xpose.msra.mxu0 0.0
  %423 = vmatprep.subr.mxu0 0.0
  %424 = vmatpush1.xpose.msra.mxu0 0.0
  %425 = vmatprep.subr.mxu0 0.0
  %426 = vmatpush1.xpose.msra.mxu0 0.0
  %427 = vmatprep.subr.mxu0 0.0
  %428 = vmatpush1.xpose.msra.mxu0 0.0
  %429 = vmatprep.subr.mxu0 0.0
  %430 = vmatpush1.xpose.msra.mxu0 0.0
  %431 = vmatprep.subr.mxu0 0.0
  %432 = vmatpush1.xpose.msra.mxu0 0.0
  %433 = vmatprep.subr.mxu0 0.0
  %434 = vmatpush1.xpose.msra.mxu0 0.0
  %435 = vmatprep.subr.mxu0 0.0
  %436 = vmatpush1.xpose.msra.mxu0 0.0
  %437 = vmatprep.subr.mxu0 0.0
  %438 = vmatpush1.xpose.msra.mxu0 0.0
  %439 = vmatprep.subr.mxu0 0.0
  %440 = vmatpush1.xpose.msra.mxu0 0.0
  %441 = vmatprep.subr.mxu0 0.0
  %442 = vmatpush1.xpose.msra.mxu0 0.0
  %443 = vmatprep.subr.mxu0 0.0
  %444 = vmatpush1.xpose.msra.mxu0 0.0
  %445 = vmatprep.subr.mxu0 0.0
  %446 = vmatpush1.xpose.msra.mxu0 0.0
  %447 = vmatprep.subr.mxu0 0.0
  %448 = vmatpush1.xpose.msra.mxu0 0.0
  %449 = vmatprep.subr.mxu0 0.0
  %450 = vmatpush1.xpose.msra.mxu0 0.0
  %451 = vmatprep.subr.mxu0 0.0
  %452 = vmatpush1.xpose.msra.mxu0 0.0
  %453 = vmatprep.subr.mxu0 0.0
  %454 = vmatpush1.xpose.msra.mxu0 0.0
  %455 = vmatprep.subr.mxu0 0.0
  %456 = vmatpush1.xpose.msra.mxu0 0.0
  %457 = vmatprep.subr.mxu0 0.0
  %458 = vmatpush1.xpose.msra.mxu0 0.0
  %459 = vmatprep.subr.mxu0 0.0
  %460 = vmatpush1.xpose.msra.mxu0 0.0
  %461 = vmatprep.subr.mxu0 0.0
  %462 = vmatpush1.xpose.msra.mxu0 0.0
  %463 = vmatprep.subr.mxu0 0.0
  %464 = vmatpush1.xpose.msra.mxu0 0.0
  %465 = vmatprep.subr.mxu0 0.0
  %466 = vmatpush1.xpose.msra.mxu0 0.0
  %467 = vmatprep.subr.mxu0 0.0
  %468 = vmatpush1.xpose.msra.mxu0 0.0
  %469 = vmatprep.subr.mxu0 0.0
  %470 = vmatpush1.xpose.msra.mxu0 0.0
  %471 = vmatprep.subr.mxu0 0.0
  %472 = vmatpush1.xpose.msra.mxu0 0.0
  %473 = vmatprep.subr.mxu0 0.0
  %474 = vmatpush1.xpose.msra.mxu0 0.0
  %475 = vmatprep.subr.mxu0 0.0
  %476 = vmatpush1.xpose.msra.mxu0 0.0
  %477 = vmatprep.subr.mxu0 0.0
  %478 = vmatpush1.xpose.msra.mxu0 0.0
  %479 = vmatprep.mubr.f32.mxu0 0.0
  %480 = vmatmul.mubr.f32.gmra.mrb[0].mxu0 %v45
  %v481 = vpop.f32.mrb[0].mxu0
  %v482 = vadd.f32 0.0, %v481
  %v483 = vpop.f32.mrb[0].mxu0
  %484 = vdwg.mxu0
  %v485 = vlaneseq
  %v486 = vshrl.u32 %v485, 7
  %v487 = vsub.s32 0, %v486
  %v488 = vrot.slane %v482, %v487
  %v489 = vadd.f32 %v403, %v488
  %v490 = vadd.f32 %v406, %v488
  %vm491 = vcmp.ge.f32.partialorder %v489, 0.0
  %vm492 = vcmp.ge.f32.partialorder %v490, 0.0
  %v493 = vmul.f32 %v489, 0.2
  %v494 = vmul.f32 %v490, 0.2
  %v495 = vsel %vm491, %v489, %v493
  %v496 = vsel %vm492, %v490, %v494
  %v497 = vadd.f32 %v495, %v23
  %v498 = vadd.f32 %v496, %v24
  %v499 = vsel %vm137, %v497, -inf
  %500 = vmax.xlane.f32.xlu0 %v499
  %v501 = vpop.xlane.xlu0 %500
  %v502 = vsel %vm137, %v498, -inf
  %503 = vmax.xlane.f32.xlu0 %v502
  %v504 = vpop.xlane.xlu0 %503
  %v505 = vsub.f32 %v497, %v501
  %v506 = vsub.f32 %v498, %v504
  %v507 = vmul.f32 %v505, 1.442695
  %v508 = vpow.pop %v507
  %v509 = vmul.f32 %v506, 1.442695
  %v510 = vpow.pop %v509
  %v511 = vsel %vm137, %v508, 0.0
  %512 = vadd.xlane.f32.xlu0 %v511
  %v513 = vpop.xlane.xlu0 %512
  %v514 = vsel %vm137, %v510, 0.0
  %515 = vadd.xlane.f32.xlu0 %v514
  %v516 = vpop.xlane.xlu0 %515
  %v517 = vpack.c.bf16 %v510, %v508
  %518 = vrot.lane.b32.xlu0 %v157, 120
  %v519 = vpop.permute.xlu0 %518
  %v522 = vsel %vm137, %v517, 0
  %524 = vmatprep.subr.bf16.mxu0 0
  %525 = vmatpush1.bf16.msra.mxu0 %v519
  %526 = vmatprep.subr.bf16.mxu0 0
  %527 = vmatpush1.bf16.msra.mxu0 0
  %528 = vmatprep.subr.bf16.mxu0 0
  %529 = vmatpush1.bf16.msra.mxu0 0
  %530 = vmatprep.subr.bf16.mxu0 0
  %531 = vmatpush1.bf16.msra.mxu0 0
  %532 = vmatprep.subr.bf16.mxu0 0
  %533 = vmatpush1.bf16.msra.mxu0 0
  %534 = vmatprep.subr.bf16.mxu0 0
  %535 = vmatpush1.bf16.msra.mxu0 0
  %536 = vmatprep.subr.bf16.mxu0 0
  %537 = vmatpush1.bf16.msra.mxu0 0
  %538 = vmatprep.subr.bf16.mxu0 0
  %539 = vmatpush1.bf16.msra.mxu0 0
  %540 = vmatprep.subr.bf16.mxu0 0
  %541 = vmatpush1.bf16.msra.mxu0 0
  %542 = vmatprep.subr.bf16.mxu0 0
  %543 = vmatpush1.bf16.msra.mxu0 0
  %544 = vmatprep.subr.bf16.mxu0 0
  %545 = vmatpush1.bf16.msra.mxu0 0
  %546 = vmatprep.subr.bf16.mxu0 0
  %547 = vmatpush1.bf16.msra.mxu0 0
  %548 = vmatprep.subr.bf16.mxu0 0
  %549 = vmatpush1.bf16.msra.mxu0 0
  %550 = vmatprep.subr.bf16.mxu0 0
  %551 = vmatpush1.bf16.msra.mxu0 0
  %552 = vmatprep.subr.bf16.mxu0 0
  %553 = vmatpush1.bf16.msra.mxu0 0
  %554 = vmatprep.subr.bf16.mxu0 0
  %555 = vmatpush1.bf16.msra.mxu0 0
  %556 = vmatprep.mubr.bf16.mxu0 0
  %557 = vmatmul.mubr.bf16.gmra.mrb[0].mxu0 %v522
  %v558 = vpop.f32.mrb[0].mxu0
  %v559 = vadd.f32 0.0, %v558
  %v560 = vpop.f32.mrb[0].mxu0
  %v561 = vpop.f32.mrb[0].mxu0
  %v562 = vadd.f32 0.0, %v561
  %v563 = vpop.f32.mrb[0].mxu0
  %564 = vdwg.mxu0
  %v565 = vrcp.pop %v513
  %v566 = vrcp.pop %v516
  %v567 = vmul.f32 %v559, %v565
  %v568 = vmul.f32 %v562, %v566
  %569 = vrot.lane.b32.xlu0 %v33, 12
  %v570 = vpop.permute.xlu0 %569
  %v572 = vmul.f32 %v25, %v570
  %v573 = vmul.f32 %v26, %v570
  %576 = vrot.lane.b32.xlu0 %v572, 116
  %v577 = vpop.permute.xlu0 %576
  %578 = vrot.lane.b32.xlu0 %v573, 116
  %v579 = vpop.permute.xlu0 %578
  %v582 = vsel %vm37, %v577, 0.0
  %583 = vadd.xlane.f32.xlu0 %v582
  %v584 = vpop.xlane.xlu0 %583
  %v585 = vsel %vm37, %v579, 0.0
  %586 = vadd.xlane.f32.xlu0 %v585
  %v587 = vpop.xlane.xlu0 %586
  %588 = vrot.lane.b32.xlu0 %v27, 116
  %v589 = vpop.permute.xlu0 %588
  %590 = vrot.lane.b32.xlu0 %v28, 116
  %v591 = vpop.permute.xlu0 %590
  %v592 = vsel %vm37, %v589, 0
  %v594 = vsel %vm37, %v591, 0
  %596 = vmatprep.subr.mxu0 0.0
  %597 = vmatpush1.xpose.msra.mxu0 %v592
  %598 = vmatprep.subr.mxu0 0.0
  %599 = vmatpush1.xpose.msra.mxu0 %v594
  %600 = vmatprep.subr.mxu0 0.0
  %601 = vmatpush1.xpose.msra.mxu0 0.0
  %602 = vmatprep.subr.mxu0 0.0
  %603 = vmatpush1.xpose.msra.mxu0 0.0
  %604 = vmatprep.subr.mxu0 0.0
  %605 = vmatpush1.xpose.msra.mxu0 0.0
  %606 = vmatprep.subr.mxu0 0.0
  %607 = vmatpush1.xpose.msra.mxu0 0.0
  %608 = vmatprep.subr.mxu0 0.0
  %609 = vmatpush1.xpose.msra.mxu0 0.0
  %610 = vmatprep.subr.mxu0 0.0
  %611 = vmatpush1.xpose.msra.mxu0 0.0
  %612 = vmatprep.subr.mxu0 0.0
  %613 = vmatpush1.xpose.msra.mxu0 0.0
  %614 = vmatprep.subr.mxu0 0.0
  %615 = vmatpush1.xpose.msra.mxu0 0.0
  %616 = vmatprep.subr.mxu0 0.0
  %617 = vmatpush1.xpose.msra.mxu0 0.0
  %618 = vmatprep.subr.mxu0 0.0
  %619 = vmatpush1.xpose.msra.mxu0 0.0
  %620 = vmatprep.subr.mxu0 0.0
  %621 = vmatpush1.xpose.msra.mxu0 0.0
  %622 = vmatprep.subr.mxu0 0.0
  %623 = vmatpush1.xpose.msra.mxu0 0.0
  %624 = vmatprep.subr.mxu0 0.0
  %625 = vmatpush1.xpose.msra.mxu0 0.0
  %626 = vmatprep.subr.mxu0 0.0
  %627 = vmatpush1.xpose.msra.mxu0 0.0
  %628 = vmatprep.subr.mxu0 0.0
  %629 = vmatpush1.xpose.msra.mxu0 0.0
  %630 = vmatprep.subr.mxu0 0.0
  %631 = vmatpush1.xpose.msra.mxu0 0.0
  %632 = vmatprep.subr.mxu0 0.0
  %633 = vmatpush1.xpose.msra.mxu0 0.0
  %634 = vmatprep.subr.mxu0 0.0
  %635 = vmatpush1.xpose.msra.mxu0 0.0
  %636 = vmatprep.subr.mxu0 0.0
  %637 = vmatpush1.xpose.msra.mxu0 0.0
  %638 = vmatprep.subr.mxu0 0.0
  %639 = vmatpush1.xpose.msra.mxu0 0.0
  %640 = vmatprep.subr.mxu0 0.0
  %641 = vmatpush1.xpose.msra.mxu0 0.0
  %642 = vmatprep.subr.mxu0 0.0
  %643 = vmatpush1.xpose.msra.mxu0 0.0
  %644 = vmatprep.subr.mxu0 0.0
  %645 = vmatpush1.xpose.msra.mxu0 0.0
  %646 = vmatprep.subr.mxu0 0.0
  %647 = vmatpush1.xpose.msra.mxu0 0.0
  %648 = vmatprep.subr.mxu0 0.0
  %649 = vmatpush1.xpose.msra.mxu0 0.0
  %650 = vmatprep.subr.mxu0 0.0
  %651 = vmatpush1.xpose.msra.mxu0 0.0
  %652 = vmatprep.subr.mxu0 0.0
  %653 = vmatpush1.xpose.msra.mxu0 0.0
  %654 = vmatprep.subr.mxu0 0.0
  %655 = vmatpush1.xpose.msra.mxu0 0.0
  %656 = vmatprep.subr.mxu0 0.0
  %657 = vmatpush1.xpose.msra.mxu0 0.0
  %658 = vmatprep.subr.mxu0 0.0
  %659 = vmatpush1.xpose.msra.mxu0 0.0
  %660 = vmatprep.mubr.f32.mxu0 0.0
  %661 = vmatmul.mubr.f32.gmra.mrb[0].mxu0 %v45
  %v662 = vpop.f32.mrb[0].mxu0
  %v663 = vadd.f32 0.0, %v662
  %v664 = vpop.f32.mrb[0].mxu0
  %665 = vdwg.mxu0
  %v666 = vlaneseq
  %v667 = vshrl.u32 %v666, 7
  %v668 = vsub.s32 0, %v667
  %v669 = vrot.slane %v663, %v668
  %v670 = vadd.f32 %v584, %v669
  %v671 = vadd.f32 %v587, %v669
  %vm672 = vcmp.ge.f32.partialorder %v670, 0.0
  %vm673 = vcmp.ge.f32.partialorder %v671, 0.0
  %v674 = vmul.f32 %v670, 0.2
  %v675 = vmul.f32 %v671, 0.2
  %v676 = vsel %vm672, %v670, %v674
  %v677 = vsel %vm673, %v671, %v675
  %v678 = vadd.f32 %v676, %v23
  %v679 = vadd.f32 %v677, %v24
  %v680 = vsel %vm137, %v678, -inf
  %681 = vmax.xlane.f32.xlu0 %v680
  %v682 = vpop.xlane.xlu0 %681
  %v683 = vsel %vm137, %v679, -inf
  %684 = vmax.xlane.f32.xlu0 %v683
  %v685 = vpop.xlane.xlu0 %684
  %v686 = vsub.f32 %v678, %v682
  %v687 = vsub.f32 %v679, %v685
  %v688 = vmul.f32 %v686, 1.442695
  %v689 = vpow.pop %v688
  %v690 = vmul.f32 %v687, 1.442695
  %v691 = vpow.pop %v690
  %v692 = vsel %vm137, %v689, 0.0
  %693 = vadd.xlane.f32.xlu0 %v692
  %v694 = vpop.xlane.xlu0 %693
  %v695 = vsel %vm137, %v691, 0.0
  %696 = vadd.xlane.f32.xlu0 %v695
  %v697 = vpop.xlane.xlu0 %696
  %v698 = vpack.c.bf16 %v691, %v689
  %699 = vrot.lane.b32.xlu0 %v157, 116
  %v700 = vpop.permute.xlu0 %699
  %v703 = vsel %vm137, %v698, 0
  %705 = vmatprep.subr.bf16.mxu0 0
  %706 = vmatpush1.bf16.msra.mxu0 %v700
  %707 = vmatprep.subr.bf16.mxu0 0
  %708 = vmatpush1.bf16.msra.mxu0 0
  %709 = vmatprep.subr.bf16.mxu0 0
  %710 = vmatpush1.bf16.msra.mxu0 0
  %711 = vmatprep.subr.bf16.mxu0 0
  %712 = vmatpush1.bf16.msra.mxu0 0
  %713 = vmatprep.subr.bf16.mxu0 0
  %714 = vmatpush1.bf16.msra.mxu0 0
  %715 = vmatprep.subr.bf16.mxu0 0
  %716 = vmatpush1.bf16.msra.mxu0 0
  %717 = vmatprep.subr.bf16.mxu0 0
  %718 = vmatpush1.bf16.msra.mxu0 0
  %719 = vmatprep.subr.bf16.mxu0 0
  %720 = vmatpush1.bf16.msra.mxu0 0
  %721 = vmatprep.subr.bf16.mxu0 0
  %722 = vmatpush1.bf16.msra.mxu0 0
  %723 = vmatprep.subr.bf16.mxu0 0
  %724 = vmatpush1.bf16.msra.mxu0 0
  %725 = vmatprep.subr.bf16.mxu0 0
  %726 = vmatpush1.bf16.msra.mxu0 0
  %727 = vmatprep.subr.bf16.mxu0 0
  %728 = vmatpush1.bf16.msra.mxu0 0
  %729 = vmatprep.subr.bf16.mxu0 0
  %730 = vmatpush1.bf16.msra.mxu0 0
  %731 = vmatprep.subr.bf16.mxu0 0
  %732 = vmatpush1.bf16.msra.mxu0 0
  %733 = vmatprep.subr.bf16.mxu0 0
  %734 = vmatpush1.bf16.msra.mxu0 0
  %735 = vmatprep.subr.bf16.mxu0 0
  %736 = vmatpush1.bf16.msra.mxu0 0
  %737 = vmatprep.mubr.bf16.mxu0 0
  %738 = vmatmul.mubr.bf16.gmra.mrb[0].mxu0 %v703
  %v739 = vpop.f32.mrb[0].mxu0
  %v740 = vadd.f32 0.0, %v739
  %v741 = vpop.f32.mrb[0].mxu0
  %v742 = vpop.f32.mrb[0].mxu0
  %v743 = vadd.f32 0.0, %v742
  %v744 = vpop.f32.mrb[0].mxu0
  %745 = vdwg.mxu0
  %v746 = vrcp.pop %v694
  %v747 = vrcp.pop %v697
  %v748 = vmul.f32 %v740, %v746
  %v749 = vmul.f32 %v743, %v747
  %752 = vrot.lane.b32.xlu0 %v386, 4
  %v753 = vpop.permute.xlu0 %752
  %754 = vrot.lane.b32.xlu0 %v387, 4
  %v755 = vpop.permute.xlu0 %754
  %760 = vrot.lane.b32.xlu0 %v567, 8
  %v761 = vpop.permute.xlu0 %760
  %762 = vrot.lane.b32.xlu0 %v568, 8
  %v763 = vpop.permute.xlu0 %762
  %768 = vrot.lane.b32.xlu0 %v748, 12
  %v769 = vpop.permute.xlu0 %768
  %770 = vrot.lane.b32.xlu0 %v749, 12
  %v771 = vpop.permute.xlu0 %770
  %v774 = vsel %vm37, %v204, %v753
  %v775 = vsel %vm37, %v205, %v755
  %vm776 = vcmask 64512
  %v777 = vsel %vm776, %v774, %v761
  %v778 = vsel %vm776, %v775, %v763
  %vm779 = vcmask 97280
  %v780 = vsel %vm779, %v777, %v769
  %v781 = vsel %vm779, %v778, %v771
  %782 = vst.msk [vmem:[%s5] sm:$0xff] %vm137, %v780
  %783 = vst.msk [vmem:[%s5 + $0x8] sm:$0xff] %vm137, %v781
  // Predicated region
  $region22: #{gatnet_forward.5} parent=0 // pred_check
    _
  $region23: #{gatnet_forward.5} parent=0 // pred_check_branch
    %785 = sbr.rel (0) target = $region25
  $region24: #{gatnet_forward.5} parent=0 // pred_region
    _
  $region25: #{gatnet_forward.5} parent=0 // pred_fallthru
    _
  // Predicated region
  $region26: #{gatnet_forward.5} parent=0 // pred_check
    _
  $region27: #{gatnet_forward.5} parent=0 // pred_check_branch
    %787 = sbr.rel (0) target = $region29
  $region28: #{gatnet_forward.5} parent=0 // pred_region
    _
  $region29: #{gatnet_forward.5} parent=0 // pred_fallthru
    _

// kernel: gatnet_forward.6
$region0: #{gatnet_forward.6}
  #allocation0 [shape = 'u32[]', space=smem, size = 0x4, offset = 0x4, fixed_abs, tag = 'smem constant byte address 0x4 - core index']
  #allocation1 [shape = 'u32[144,128]{1,0:T(1,128)}', space=vmem, size = 0x12000, scoped, tag = 'internal scratch']
  %s0 = inlined_call_operand.vmem [shape: f32[16,16], index: 0, kind: input, shape index: {}]
  %s1 = inlined_call_operand.vmem [shape: bf16[16,4], index: 1, kind: input, shape index: {}]
  %s2 = inlined_call_operand.vmem [shape: f32[16,4], index: 2, kind: output, shape index: {}]
  %s3 = sld [smem:[#allocation0]]
  $region18: #{gatnet_forward.6} parent=0
    _
  %s5 = ssub.s32 1, %s3
  %s6 = scalar_select 0, %s5, %s3
  // Predicated region
  $region2: #{gatnet_forward.6} parent=0 // pred_check
    _
  $region3: #{gatnet_forward.6} parent=0 // pred_check_branch
    %8 = sbr.rel (0) target = $region5
  $region4: #{gatnet_forward.6} parent=0 // pred_region
    _
  $region5: #{gatnet_forward.6} parent=0 // pred_fallthru
    _
  // Predicated region
  $region6: #{gatnet_forward.6} parent=0 // pred_check
    _
  $region7: #{gatnet_forward.6} parent=0 // pred_check_branch
    %10 = sbr.rel (0) target = $region9
  $region8: #{gatnet_forward.6} parent=0 // pred_region
    _
  $region9: #{gatnet_forward.6} parent=0 // pred_fallthru
    _
  %v12 = vld [vmem:[%s0] sm:$0xff]
  %v13 = vld [vmem:[%s0 + $0x8] sm:$0xff]
  %vm14 = vcmp.gt.f32.partialorder %v12, 0.0
  %vm15 = vcmp.gt.f32.partialorder %v13, 0.0
  %v16 = vmul.f32 %v12, 1.442695
  %v17 = vpow.pop %v16
  %v18 = vmul.f32 %v13, 1.442695
  %v19 = vpow.pop %v18
  %v20 = vsub.f32 %v17, 1.0
  %v21 = vsub.f32 %v19, 1.0
  %v22 = vsel %vm14, %v12, %v20
  %v23 = vsel %vm15, %v13, %v21
  %v24 = vpack.c.bf16 %v23, %v22
  %v25 = vld [vmem:[%s1] sm:$0xf]
  %v26 = vld [vmem:[%s1 + $0x4] sm:$0xf]
  %v29 = vunpack.c.l.b16 %v25
  %v30 = vunpack.c.l.b16 %v26
  %v31 = vpack.c.b16 %v30, %v29
  %vm33 = vcmask 130048
  %v35 = vsel %vm33, %v24, 0
  %37 = vmatprep.subr.bf16.mxu0 0
  %38 = vmatpush1.bf16.msra.mxu0 %v31
  %39 = vmatprep.subr.bf16.mxu0 0
  %40 = vmatpush1.bf16.msra.mxu0 0
  %41 = vmatprep.subr.bf16.mxu0 0
  %42 = vmatpush1.bf16.msra.mxu0 0
  %43 = vmatprep.subr.bf16.mxu0 0
  %44 = vmatpush1.bf16.msra.mxu0 0
  %45 = vmatprep.subr.bf16.mxu0 0
  %46 = vmatpush1.bf16.msra.mxu0 0
  %47 = vmatprep.subr.bf16.mxu0 0
  %48 = vmatpush1.bf16.msra.mxu0 0
  %49 = vmatprep.subr.bf16.mxu0 0
  %50 = vmatpush1.bf16.msra.mxu0 0
  %51 = vmatprep.subr.bf16.mxu0 0
  %52 = vmatpush1.bf16.msra.mxu0 0
  %53 = vmatprep.subr.bf16.mxu0 0
  %54 = vmatpush1.bf16.msra.mxu0 0
  %55 = vmatprep.subr.bf16.mxu0 0
  %56 = vmatpush1.bf16.msra.mxu0 0
  %57 = vmatprep.subr.bf16.mxu0 0
  %58 = vmatpush1.bf16.msra.mxu0 0
  %59 = vmatprep.subr.bf16.mxu0 0
  %60 = vmatpush1.bf16.msra.mxu0 0
  %61 = vmatprep.subr.bf16.mxu0 0
  %62 = vmatpush1.bf16.msra.mxu0 0
  %63 = vmatprep.subr.bf16.mxu0 0
  %64 = vmatpush1.bf16.msra.mxu0 0
  %65 = vmatprep.subr.bf16.mxu0 0
  %66 = vmatpush1.bf16.msra.mxu0 0
  %67 = vmatprep.subr.bf16.mxu0 0
  %68 = vmatpush1.bf16.msra.mxu0 0
  %69 = vmatprep.mubr.bf16.mxu0 0
  %70 = vmatmul.mubr.bf16.gmra.mrb[0].mxu0 %v35
  %v71 = vpop.f32.mrb[0].mxu0
  %v72 = vadd.f32 0.0, %v71
  %v73 = vpop.f32.mrb[0].mxu0
  %v74 = vpop.f32.mrb[0].mxu0
  %v75 = vadd.f32 0.0, %v74
  %v76 = vpop.f32.mrb[0].mxu0
  %77 = vdwg.mxu0
  %vm78 = vcmask 31744
  %79 = vst.msk [vmem:[%s2] sm:$0xff] %vm78, %v72
  %80 = vst.msk [vmem:[%s2 + $0x8] sm:$0xff] %vm78, %v75
  // Predicated region
  $region10: #{gatnet_forward.6} parent=0 // pred_check
    _
  $region11: #{gatnet_forward.6} parent=0 // pred_check_branch
    %82 = sbr.rel (0) target = $region13
  $region12: #{gatnet_forward.6} parent=0 // pred_region
    _
  $region13: #{gatnet_forward.6} parent=0 // pred_fallthru
    _
  // Predicated region
  $region14: #{gatnet_forward.6} parent=0 // pred_check
    _
  $region15: #{gatnet_forward.6} parent=0 // pred_check_branch
    %84 = sbr.rel (0) target = $region17
  $region16: #{gatnet_forward.6} parent=0 // pred_region
    _
  $region17: #{gatnet_forward.6} parent=0 // pred_fallthru
    _

// kernel: gatnet_forward.7
$region0: #{gatnet_forward.7}
  #allocation0 [shape = 'u32[]', space=smem, size = 0x4, offset = 0x4, fixed_abs, tag = 'smem constant byte address 0x4 - core index']
  #allocation1 [shape = 'u32[144,128]{1,0:T(1,128)}', space=vmem, size = 0x12000, scoped, tag = 'internal scratch']
  %s0 = inlined_call_operand.vmem [shape: f32[16,4], index: 0, kind: input, shape index: {}, may-alias: {0,1}]
  %s1 = inlined_call_operand.vmem [shape: f32[16,4], index: 1, kind: input, shape index: {}, may-alias: {0,1}]
  %s2 = inlined_call_operand.vmem [shape: f32[1,4], index: 2, kind: input, shape index: {}]
  %s3 = inlined_call_operand.vmem [shape: f32[1,4], index: 3, kind: input, shape index: {}]
  %s4 = inlined_call_operand.vmem [shape: f32[16,16], index: 4, kind: input, shape index: {}]
  %s5 = inlined_call_operand.vmem [shape: f32[16,4], index: 5, kind: output, shape index: {}]
  %s6 = sld [smem:[#allocation0]]
  $region30: #{gatnet_forward.7} parent=0
    _
  %s8 = ssub.s32 1, %s6
  %s9 = scalar_select 0, %s8, %s6
  // Predicated region
  $region2: #{gatnet_forward.7} parent=0 // pred_check
    _
  $region3: #{gatnet_forward.7} parent=0 // pred_check_branch
    %11 = sbr.rel (0) target = $region5
  $region4: #{gatnet_forward.7} parent=0 // pred_region
    _
  $region5: #{gatnet_forward.7} parent=0 // pred_fallthru
    _
  // Predicated region
  $region6: #{gatnet_forward.7} parent=0 // pred_check
    _
  $region7: #{gatnet_forward.7} parent=0 // pred_check_branch
    %13 = sbr.rel (0) target = $region9
  $region8: #{gatnet_forward.7} parent=0 // pred_region
    _
  $region9: #{gatnet_forward.7} parent=0 // pred_fallthru
    _
  // Predicated region
  $region10: #{gatnet_forward.7} parent=0 // pred_check
    _
  $region11: #{gatnet_forward.7} parent=0 // pred_check_branch
    %15 = sbr.rel (0) target = $region13
  $region12: #{gatnet_forward.7} parent=0 // pred_region
    _
  $region13: #{gatnet_forward.7} parent=0 // pred_fallthru
    _
  // Predicated region
  $region14: #{gatnet_forward.7} parent=0 // pred_check
    _
  $region15: #{gatnet_forward.7} parent=0 // pred_check_branch
    %17 = sbr.rel (0) target = $region17
  $region16: #{gatnet_forward.7} parent=0 // pred_region
    _
  $region17: #{gatnet_forward.7} parent=0 // pred_fallthru
    _
  // Predicated region
  $region18: #{gatnet_forward.7} parent=0 // pred_check
    _
  $region19: #{gatnet_forward.7} parent=0 // pred_check_branch
    %19 = sbr.rel (0) target = $region21
  $region20: #{gatnet_forward.7} parent=0 // pred_region
    _
  $region21: #{gatnet_forward.7} parent=0 // pred_fallthru
    _
  %v21 = vld [vmem:[%s2] sm:$0x1]
  %v22 = vld [vmem:[%s3] sm:$0x1]
  %v23 = vld [vmem:[%s4] sm:$0xff]
  %v24 = vld [vmem:[%s4 + $0x8] sm:$0xff]
  %v25 = vld [vmem:[%s0] sm:$0xff]
  %v26 = vld [vmem:[%s0 + $0x8] sm:$0xff]
  %v27 = vld [vmem:[%s1] sm:$0xff]
  %v28 = vld [vmem:[%s1 + $0x8] sm:$0xff]
  %v30 = vlaneseq
  %v31 = vshrl.u32 %v30, 7
  %v32 = vsub.s32 0, %v31
  %v33 = vrot.slane %v21, %v32
  %v35 = vmul.f32 %v25, %v33
  %v36 = vmul.f32 %v26, %v33
  %vm37 = vcmask 31744
  %v38 = vsel %vm37, %v35, 0.0
  %39 = vadd.xlane.f32.xlu0 %v38
  %v40 = vpop.xlane.xlu0 %39
  %v41 = vsel %vm37, %v36, 0.0
  %42 = vadd.xlane.f32.xlu0 %v41
  %v43 = vpop.xlane.xlu0 %42
  %v45 = vsel %vm37, %v22, 0
  %v48 = vsel %vm37, %v27, 0
  %v51 = vsel %vm37, %v28, 0
  %53 = vmatprep.subr.mxu0 0.0
  %54 = vmatpush1.xpose.msra.mxu0 %v48
  %55 = vmatprep.subr.mxu0 0.0
  %56 = vmatpush1.xpose.msra.mxu0 %v51
  %57 = vmatprep.subr.mxu0 0.0
  %58 = vmatpush1.xpose.msra.mxu0 0.0
  %59 = vmatprep.subr.mxu0 0.0
  %60 = vmatpush1.xpose.msra.mxu0 0.0
  %61 = vmatprep.subr.mxu0 0.0
  %62 = vmatpush1.xpose.msra.mxu0 0.0
  %63 = vmatprep.subr.mxu0 0.0
  %64 = vmatpush1.xpose.msra.mxu0 0.0
  %65 = vmatprep.subr.mxu0 0.0
  %66 = vmatpush1.xpose.msra.mxu0 0.0
  %67 = vmatprep.subr.mxu0 0.0
  %68 = vmatpush1.xpose.msra.mxu0 0.0
  %69 = vmatprep.subr.mxu0 0.0
  %70 = vmatpush1.xpose.msra.mxu0 0.0
  %71 = vmatprep.subr.mxu0 0.0
  %72 = vmatpush1.xpose.msra.mxu0 0.0
  %73 = vmatprep.subr.mxu0 0.0
  %74 = vmatpush1.xpose.msra.mxu0 0.0
  %75 = vmatprep.subr.mxu0 0.0
  %76 = vmatpush1.xpose.msra.mxu0 0.0
  %77 = vmatprep.subr.mxu0 0.0
  %78 = vmatpush1.xpose.msra.mxu0 0.0
  %79 = vmatprep.subr.mxu0 0.0
  %80 = vmatpush1.xpose.msra.mxu0 0.0
  %81 = vmatprep.subr.mxu0 0.0
  %82 = vmatpush1.xpose.msra.mxu0 0.0
  %83 = vmatprep.subr.mxu0 0.0
  %84 = vmatpush1.xpose.msra.mxu0 0.0
  %85 = vmatprep.subr.mxu0 0.0
  %86 = vmatpush1.xpose.msra.mxu0 0.0
  %87 = vmatprep.subr.mxu0 0.0
  %88 = vmatpush1.xpose.msra.mxu0 0.0
  %89 = vmatprep.subr.mxu0 0.0
  %90 = vmatpush1.xpose.msra.mxu0 0.0
  %91 = vmatprep.subr.mxu0 0.0
  %92 = vmatpush1.xpose.msra.mxu0 0.0
  %93 = vmatprep.subr.mxu0 0.0
  %94 = vmatpush1.xpose.msra.mxu0 0.0
  %95 = vmatprep.subr.mxu0 0.0
  %96 = vmatpush1.xpose.msra.mxu0 0.0
  %97 = vmatprep.subr.mxu0 0.0
  %98 = vmatpush1.xpose.msra.mxu0 0.0
  %99 = vmatprep.subr.mxu0 0.0
  %100 = vmatpush1.xpose.msra.mxu0 0.0
  %101 = vmatprep.subr.mxu0 0.0
  %102 = vmatpush1.xpose.msra.mxu0 0.0
  %103 = vmatprep.subr.mxu0 0.0
  %104 = vmatpush1.xpose.msra.mxu0 0.0
  %105 = vmatprep.subr.mxu0 0.0
  %106 = vmatpush1.xpose.msra.mxu0 0.0
  %107 = vmatprep.subr.mxu0 0.0
  %108 = vmatpush1.xpose.msra.mxu0 0.0
  %109 = vmatprep.subr.mxu0 0.0
  %110 = vmatpush1.xpose.msra.mxu0 0.0
  %111 = vmatprep.subr.mxu0 0.0
  %112 = vmatpush1.xpose.msra.mxu0 0.0
  %113 = vmatprep.subr.mxu0 0.0
  %114 = vmatpush1.xpose.msra.mxu0 0.0
  %115 = vmatprep.subr.mxu0 0.0
  %116 = vmatpush1.xpose.msra.mxu0 0.0
  %117 = vmatprep.mubr.f32.mxu0 0.0
  %118 = vmatmul.mubr.f32.gmra.mrb[0].mxu0 %v45
  %v119 = vpop.f32.mrb[0].mxu0
  %v120 = vadd.f32 0.0, %v119
  %v121 = vpop.f32.mrb[0].mxu0
  %122 = vdwg.mxu0
  %v123 = vlaneseq
  %v124 = vshrl.u32 %v123, 7
  %v125 = vsub.s32 0, %v124
  %v126 = vrot.slane %v120, %v125
  %v127 = vadd.f32 %v40, %v126
  %v128 = vadd.f32 %v43, %v126
  %vm129 = vcmp.ge.f32.partialorder %v127, 0.0
  %vm130 = vcmp.ge.f32.partialorder %v128, 0.0
  %v131 = vmul.f32 %v127, 0.2
  %v132 = vmul.f32 %v128, 0.2
  %v133 = vsel %vm129, %v127, %v131
  %v134 = vsel %vm130, %v128, %v132
  %v135 = vadd.f32 %v133, %v23
  %v136 = vadd.f32 %v134, %v24
  %vm137 = vcmask 130048
  %v138 = vsel %vm137, %v135, -inf
  %139 = vmax.xlane.f32.xlu0 %v138
  %v140 = vpop.xlane.xlu0 %139
  %v141 = vsel %vm137, %v136, -inf
  %142 = vmax.xlane.f32.xlu0 %v141
  %v143 = vpop.xlane.xlu0 %142
  %v144 = vsub.f32 %v135, %v140
  %v145 = vsub.f32 %v136, %v143
  %v146 = vmul.f32 %v144, 1.442695
  %v147 = vpow.pop %v146
  %v148 = vmul.f32 %v145, 1.442695
  %v149 = vpow.pop %v148
  %v150 = vsel %vm137, %v147, 0.0
  %151 = vadd.xlane.f32.xlu0 %v150
  %v152 = vpop.xlane.xlu0 %151
  %v153 = vsel %vm137, %v149, 0.0
  %154 = vadd.xlane.f32.xlu0 %v153
  %v155 = vpop.xlane.xlu0 %154
  %v156 = vpack.c.bf16 %v149, %v147
  %v157 = vpack.c.bf16 %v28, %v27
  %v159 = vsel %vm137, %v156, 0
  %161 = vmatprep.subr.bf16.mxu0 0
  %162 = vmatpush1.bf16.msra.mxu0 %v157
  %163 = vmatprep.subr.bf16.mxu0 0
  %164 = vmatpush1.bf16.msra.mxu0 0
  %165 = vmatprep.subr.bf16.mxu0 0
  %166 = vmatpush1.bf16.msra.mxu0 0
  %167 = vmatprep.subr.bf16.mxu0 0
  %168 = vmatpush1.bf16.msra.mxu0 0
  %169 = vmatprep.subr.bf16.mxu0 0
  %170 = vmatpush1.bf16.msra.mxu0 0
  %171 = vmatprep.subr.bf16.mxu0 0
  %172 = vmatpush1.bf16.msra.mxu0 0
  %173 = vmatprep.subr.bf16.mxu0 0
  %174 = vmatpush1.bf16.msra.mxu0 0
  %175 = vmatprep.subr.bf16.mxu0 0
  %176 = vmatpush1.bf16.msra.mxu0 0
  %177 = vmatprep.subr.bf16.mxu0 0
  %178 = vmatpush1.bf16.msra.mxu0 0
  %179 = vmatprep.subr.bf16.mxu0 0
  %180 = vmatpush1.bf16.msra.mxu0 0
  %181 = vmatprep.subr.bf16.mxu0 0
  %182 = vmatpush1.bf16.msra.mxu0 0
  %183 = vmatprep.subr.bf16.mxu0 0
  %184 = vmatpush1.bf16.msra.mxu0 0
  %185 = vmatprep.subr.bf16.mxu0 0
  %186 = vmatpush1.bf16.msra.mxu0 0
  %187 = vmatprep.subr.bf16.mxu0 0
  %188 = vmatpush1.bf16.msra.mxu0 0
  %189 = vmatprep.subr.bf16.mxu0 0
  %190 = vmatpush1.bf16.msra.mxu0 0
  %191 = vmatprep.subr.bf16.mxu0 0
  %192 = vmatpush1.bf16.msra.mxu0 0
  %193 = vmatprep.mubr.bf16.mxu0 0
  %194 = vmatmul.mubr.bf16.gmra.mrb[0].mxu0 %v159
  %v195 = vpop.f32.mrb[0].mxu0
  %v196 = vadd.f32 0.0, %v195
  %v197 = vpop.f32.mrb[0].mxu0
  %v198 = vpop.f32.mrb[0].mxu0
  %v199 = vadd.f32 0.0, %v198
  %v200 = vpop.f32.mrb[0].mxu0
  %201 = vdwg.mxu0
  %v202 = vrcp.pop %v152
  %v203 = vrcp.pop %v155
  %v204 = vmul.f32 %v196, %v202
  %v205 = vmul.f32 %v199, %v203
  %206 = vst.msk [vmem:[%s5] sm:$0xff] %vm37, %v204
  %207 = vst.msk [vmem:[%s5 + $0x8] sm:$0xff] %vm37, %v205
  // Predicated region
  $region22: #{gatnet_forward.7} parent=0 // pred_check
    _
  $region23: #{gatnet_forward.7} parent=0 // pred_check_branch
    %209 = sbr.rel (0) target = $region25
  $region24: #{gatnet_forward.7} parent=0 // pred_region
    _
  $region25: #{gatnet_forward.7} parent=0 // pred_fallthru
    _
  // Predicated region
  $region26: #{gatnet_forward.7} parent=0 // pred_check
    _
  $region27: #{gatnet_forward.7} parent=0 // pred_check_branch
    %211 = sbr.rel (0) target = $region29
  $region28: #{gatnet_forward.7} parent=0 // pred_region
    _
  $region29: #{gatnet_forward.7} parent=0 // pred_fallthru
    _

</llo_original>
